<compile_context>
chip_gen: v7x
topology: tpu7x:2x2x1
jax: 0.10.0
libtpu: 0.0.40
codegen_flags: <defaults>
</compile_context>

<pallas_src>
import functools

import jax
import jax.numpy as jnp
from jax.experimental import pallas as pl
from jax.experimental.pallas import tpu as pltpu

_LANE = 128


# ----------------------------- Pallas kernels ------------------------------ #

def _conv_stats_kernel(x_ref, w_ref, y_ref, psum_ref, psq_ref, *, kh, kw, toh, ow):
    """Conv for one (batch, output-row-block) tile + fused partial channel stats.

    x_ref:    (1, hp, wp, c_in)     bf16 padded input image (whole image; DMA'd
                                    once per batch element, resident across row blocks)
    w_ref:    (kh*kw*c_in, c_pad)   bf16 K-folded weights (lane-dense c_pad)
    y_ref:    (1, toh, ow, c_pad)   bf16 conv output row block
    psum_ref: (1, 1, 1, c_pad)      f32 partial per-channel sum
    psq_ref:  (1, 1, 1, c_pad)      f32 partial per-channel sum of squares
    """
    c_pad = y_ref.shape[-1]
    c_in = x_ref.shape[-1]
    rows = toh * ow

    row0 = pl.program_id(1) * toh
    if toh % 8 == 0:
        row0 = pl.multiple_of(row0, 8)
    # Row band covering this output block plus its (kh-1)-row halo.
    band = x_ref[0, pl.ds(row0, toh + kh - 1)]            # (toh+kh-1, wp, c_in)

    # In-kernel im2col: one lane-dense (rows, kh*kw*c_in) patch matrix, built
    # once, feeding a single MXU dot with K = kh*kw*c_in.
    taps = []
    for dy in range(kh):                                   # static, unrolled
        for dx in range(kw):
            taps.append(band[dy:dy + toh, dx:dx + ow, :])  # (toh, ow, c_in)
    patches = jnp.concatenate(taps, axis=-1)               # (toh, ow, kh*kw*c_in)
    patches = patches.reshape(rows, kh * kw * c_in)

    acc = jnp.dot(patches, w_ref[...],                     # (rows, c_pad) f32 acc
                  preferred_element_type=jnp.float32)

    y_ref[...] = acc.reshape(1, toh, ow, c_pad).astype(y_ref.dtype)

    # Fused batch-stat partials, taken from the f32 accumulator.
    psum_ref[...] = jnp.sum(acc, axis=0).reshape(1, 1, 1, c_pad)
    psq_ref[...] = jnp.sum(acc * acc, axis=0).reshape(1, 1, 1, c_pad)


def _bn_relu_kernel(y_ref, scale_ref, bias_ref, o_ref):
    # Fused affine-normalize + ReLU over one (1, toh, ow, c_pad) tile.
    # y is stored bf16; BN math is done in f32.
    y = y_ref[...].astype(jnp.float32)
    o_ref[...] = jnp.maximum(y * scale_ref[...] + bias_ref[...], 0.0)


# ------------------------------ Host wrapper ------------------------------- #

def _pick_row_block(oh, requested):
    """Largest divisor of oh that is <= requested (prefer multiples of 8)."""
    requested = max(1, min(int(requested), oh))
    divs = [t for t in range(1, requested + 1) if oh % t == 0]
    mult8 = [t for t in divs if t % 8 == 0]
    return (mult8 or divs)[-1]


@functools.partial(jax.jit, static_argnames=("eps", "pad", "row_block"))
def basic_conv2d(x, weight, gamma, beta, *, eps=1e-3, pad=1, row_block=64):
    """BasicConv2d forward. x: (N, C_in, H, W) f32, weight: (C_out, C_in, KH, KW)."""
    n, c_in, h, w = x.shape
    c_out, c_in_w, kh, kw = weight.shape
    assert c_in == c_in_w
    oh = h + 2 * pad - kh + 1            # stride=1 (SASNet usage: 3x3, pad=1)
    ow = w + 2 * pad - kw + 1
    hp, wp = h + 2 * pad, w + 2 * pad
    c_pad = _LANE * pl.cdiv(c_out, _LANE)       # lane-dense output channels
    toh = _pick_row_block(oh, row_block)        # output-row block size
    nb = oh // toh

    # NCHW -> padded bf16 NHWC slab (operand dtype decided here, not in-kernel).
    x_nhwc = jnp.transpose(x, (0, 2, 3, 1))
    xp = jnp.pad(x_nhwc, ((0, 0), (pad, pad), (pad, pad), (0, 0))).astype(jnp.bfloat16)

    # weight (C_out, C_in, KH, KW) -> K-folded (KH*KW*C_in, C_pad), bf16.
    # Row order (dy, dx, ci) matches the in-kernel patch concatenation.
    w_fold = jnp.transpose(weight, (2, 3, 1, 0)).reshape(kh * kw * c_in, c_out)
    w_fold = jnp.pad(w_fold, ((0, 0), (0, c_pad - c_out))).astype(jnp.bfloat16)
    # TODO(synk): on v5e additionally pad K=kh*kw*c_in to a multiple of 128 (4x128^2 MXU).

    kern = functools.partial(_conv_stats_kernel, kh=kh, kw=kw, toh=toh, ow=ow)

    # ---- Pass 1: K-folded conv (one MXU dot per row block) + fused stats ----
    y, psum, psq = pl.pallas_call(
        kern,
        out_shape=(jax.ShapeDtypeStruct((n, oh, ow, c_pad), jnp.bfloat16),
                   jax.ShapeDtypeStruct((n, nb, 1, c_pad), jnp.float32),
                   jax.ShapeDtypeStruct((n, nb, 1, c_pad), jnp.float32)),
        grid_spec=pltpu.PrefetchScalarGridSpec(
            num_scalar_prefetch=0,
            grid=(n, nb),
            in_specs=[
                # Whole padded image per batch element; index_map ignores the
                # row axis so it is fetched once per batch element.
                pl.BlockSpec((1, hp, wp, c_in), lambda b, j: (b, 0, 0, 0)),
                pl.BlockSpec((kh * kw * c_in, c_pad), lambda b, j: (0, 0)),
            ],
            out_specs=(
                pl.BlockSpec((1, toh, ow, c_pad), lambda b, j: (b, j, 0, 0)),
                pl.BlockSpec((1, 1, 1, c_pad), lambda b, j: (b, j, 0, 0)),
                pl.BlockSpec((1, 1, 1, c_pad), lambda b, j: (b, j, 0, 0)),
            )),
        compiler_params=pltpu.CompilerParams(
            dimension_semantics=("parallel", "parallel")),
    )(xp, w_fold)

    # Tiny per-channel glue: BatchNorm training-mode batch stats (biased var),
    # folded into one scale/bias pair.  E[x^2]-mean^2 is clamped at 0 before
    # rsqrt; for activations with very large means a shifted / two-pass
    # reduction would be numerically safer.
    m = n * oh * ow
    sums = jnp.sum(psum[:, :, 0, :], axis=(0, 1))
    sqs = jnp.sum(psq[:, :, 0, :], axis=(0, 1))
    mean = sums / m
    var = jnp.maximum(sqs / m - mean * mean, 0.0)
    gamma_p = jnp.pad(gamma, (0, c_pad - c_out))          # padded channels: scale 0
    beta_p = jnp.pad(beta, (0, c_pad - c_out))            # padded channels: bias 0
    scale_v = gamma_p * jax.lax.rsqrt(var + eps)
    bias_v = beta_p - mean * scale_v
    scale = scale_v.reshape(1, c_pad).astype(jnp.float32)
    bias = bias_v.reshape(1, c_pad).astype(jnp.float32)

    # ---- Pass 2: fused normalize + ReLU (bf16 read, f32 math, f32 write) ----
    out_nhwc = pl.pallas_call(
        _bn_relu_kernel,
        out_shape=jax.ShapeDtypeStruct((n, oh, ow, c_pad), jnp.float32),
        grid_spec=pltpu.PrefetchScalarGridSpec(
            num_scalar_prefetch=0,
            grid=(n, nb),
            in_specs=[
                pl.BlockSpec((1, toh, ow, c_pad), lambda b, j: (b, j, 0, 0)),
                pl.BlockSpec((1, c_pad), lambda b, j: (0, 0)),
                pl.BlockSpec((1, c_pad), lambda b, j: (0, 0)),
            ],
            out_specs=pl.BlockSpec((1, toh, ow, c_pad), lambda b, j: (b, j, 0, 0))),
        compiler_params=pltpu.CompilerParams(
            dimension_semantics=("parallel", "parallel")),
    )(y, scale, bias)

    # Slice off padded channels; back to PyTorch NCHW (see header TODO about
    # keeping NHWC end-to-end when chaining blocks).
    return jnp.transpose(out_nhwc[:, :, :, :c_out], (0, 3, 1, 2))


# ------------------------------ Pure-JAX reference -------------------------- #

def _reference(x, weight, gamma, beta, *, eps=1e-3, pad=1):
    y = jax.lax.conv_general_dilated(
        x, weight, window_strides=(1, 1), padding=[(pad, pad), (pad, pad)],
        dimension_numbers=("NCHW", "OIHW", "NCHW"))
    mean = y.mean(axis=(0, 2, 3), keepdims=True)
    var = y.var(axis=(0, 2, 3), keepdims=True)            # biased, training-mode BN
    yhat = (y - mean) * jax.lax.rsqrt(var + eps)
    return jnp.maximum(yhat * gamma.reshape(1, -1, 1, 1) + beta.reshape(1, -1, 1, 1), 0.0)


# --------------------------------- Driver ---------------------------------- #

if __name__ == "__main__":
    key = jax.random.PRNGKey(0)
    k_x, k_w, k_g, k_b = jax.random.split(key, 4)

    N, C_IN, H, W = 2, 4, 16, 16
    C_OUT, KH, KW = 8, 3, 3     # nn.Conv2d(4, 8, kernel_size=3, padding=1, bias=False)

    x = jax.random.normal(k_x, (N, C_IN, H, W), dtype=jnp.float32)
    weight = 0.1 * jax.random.normal(k_w, (C_OUT, C_IN, KH, KW), dtype=jnp.float32)
    gamma = 1.0 + 0.05 * jax.random.normal(k_g, (C_OUT,), dtype=jnp.float32)
    beta = 0.05 * jax.random.normal(k_b, (C_OUT,), dtype=jnp.float32)

    out = basic_conv2d(x, weight, gamma, beta, row_block=8)   # 2 row blocks per image
    jax.block_until_ready(out)
    assert out.shape == (N, C_OUT, H, W)

    ref = _reference(x, weight, gamma, beta, eps=1e-3, pad=1)
    max_err = float(jnp.max(jnp.abs(out - ref)))
    assert max_err < 5e-2, f"max abs error vs reference: {max_err}"
    print("KERNEL_OK")
</pallas_src>

<mosaic_0001>
module attributes {stable_mosaic.version = 11 : i64} {
  func.func @_conv_stats_kernel(%arg0: i32, %arg1: i32, %arg2: memref<1x18x18x4xbf16, #tpu.memory_space<vmem>>, %arg3: memref<36x128xbf16, #tpu.memory_space<vmem>>, %arg4: memref<1x8x16x128xbf16, #tpu.memory_space<vmem>>, %arg5: memref<1x1x1x128xf32, #tpu.memory_space<vmem>>, %arg6: memref<1x1x1x128xf32, #tpu.memory_space<vmem>>) attributes {dimension_semantics = [#tpu.dimension_semantics<parallel>, #tpu.dimension_semantics<parallel>], iteration_bounds = array<i64: 2, 2>, scalar_prefetch = 0 : i64, scratch_operands = 0 : i64, tpu.core_type = #tpu.core_type<tc>, window_params = [{transform_indices = @transform_0, window_bounds = array<i64: 1, 18, 18, 4>}, {pipeline_mode = #tpu.pipeline_mode<synchronous>, transform_indices = @transform_1, window_bounds = array<i64: 36, 128>}, {transform_indices = @transform_2, window_bounds = array<i64: 1, 8, 16, 128>}, {transform_indices = @transform_3, window_bounds = array<i64: 1, 1, 1, 128>}, {transform_indices = @transform_4, window_bounds = array<i64: 1, 1, 1, 128>}]} {
    %c8_i32 = arith.constant 8 : i32
    %0 = arith.muli %arg1, %c8_i32 : i32
    %1 = tpu.assume_multiple %0, 8 : i32
    %c0 = arith.constant 0 : index
    %2 = arith.index_cast %1 : i32 to index
    %c0_0 = arith.constant 0 : index
    %c0_1 = arith.constant 0 : index
    %3 = vector.load %arg2[%c0, %2, %c0_0, %c0_1] : memref<1x18x18x4xbf16, #tpu.memory_space<vmem>>, vector<1x10x18x4xbf16>
    %4 = vector.shape_cast %3 : vector<1x10x18x4xbf16> to vector<10x18x4xbf16>
    %5 = vector.extract_strided_slice %4 {offsets = [0, 0, 0], sizes = [8, 16, 4], strides = [1, 1, 1]} : vector<10x18x4xbf16> to vector<8x16x4xbf16>
    %6 = vector.extract_strided_slice %4 {offsets = [0, 1, 0], sizes = [8, 16, 4], strides = [1, 1, 1]} : vector<10x18x4xbf16> to vector<8x16x4xbf16>
    %7 = vector.extract_strided_slice %4 {offsets = [0, 2, 0], sizes = [8, 16, 4], strides = [1, 1, 1]} : vector<10x18x4xbf16> to vector<8x16x4xbf16>
    %8 = vector.extract_strided_slice %4 {offsets = [1, 0, 0], sizes = [8, 16, 4], strides = [1, 1, 1]} : vector<10x18x4xbf16> to vector<8x16x4xbf16>
    %9 = vector.extract_strided_slice %4 {offsets = [1, 1, 0], sizes = [8, 16, 4], strides = [1, 1, 1]} : vector<10x18x4xbf16> to vector<8x16x4xbf16>
    %10 = vector.extract_strided_slice %4 {offsets = [1, 2, 0], sizes = [8, 16, 4], strides = [1, 1, 1]} : vector<10x18x4xbf16> to vector<8x16x4xbf16>
    %11 = vector.extract_strided_slice %4 {offsets = [2, 0, 0], sizes = [8, 16, 4], strides = [1, 1, 1]} : vector<10x18x4xbf16> to vector<8x16x4xbf16>
    %12 = vector.extract_strided_slice %4 {offsets = [2, 1, 0], sizes = [8, 16, 4], strides = [1, 1, 1]} : vector<10x18x4xbf16> to vector<8x16x4xbf16>
    %13 = vector.extract_strided_slice %4 {offsets = [2, 2, 0], sizes = [8, 16, 4], strides = [1, 1, 1]} : vector<10x18x4xbf16> to vector<8x16x4xbf16>
    %14 = tpu.concatenate %5, %6, %7, %8, %9, %10, %11, %12, %13 in 2 : vector<8x16x4xbf16>, vector<8x16x4xbf16>, vector<8x16x4xbf16>, vector<8x16x4xbf16>, vector<8x16x4xbf16>, vector<8x16x4xbf16>, vector<8x16x4xbf16>, vector<8x16x4xbf16>, vector<8x16x4xbf16> -> vector<8x16x36xbf16>
    %15 = vector.shape_cast %14 : vector<8x16x36xbf16> to vector<128x36xbf16>
    %c0_2 = arith.constant 0 : index
    %c0_3 = arith.constant 0 : index
    %16 = vector.load %arg3[%c0_2, %c0_3] : memref<36x128xbf16, #tpu.memory_space<vmem>>, vector<36x128xbf16>
    %cst = arith.constant dense<0.000000e+00> : vector<128x128xf32>
    %17 = tpu.matmul %15, %16, %cst {dimension_numbers = #tpu.dot_dimension_numbers<[1], [0], [0], [1], [0, 0, 1, 1], [], []>} : vector<128x36xbf16>, vector<36x128xbf16>, vector<128x128xf32> -> vector<128x128xf32>
    %18 = vector.shape_cast %17 : vector<128x128xf32> to vector<1x8x16x128xf32>
    %19 = arith.truncf %18 : vector<1x8x16x128xf32> to vector<1x8x16x128xbf16>
    %c0_4 = arith.constant 0 : index
    %c0_5 = arith.constant 0 : index
    %c0_6 = arith.constant 0 : index
    %c0_7 = arith.constant 0 : index
    %20 = vector.load %arg4[%c0_4, %c0_5, %c0_6, %c0_7] : memref<1x8x16x128xbf16, #tpu.memory_space<vmem>>, vector<1x8x16x128xbf16>
    tpu.vector_store %arg4[%c0_4, %c0_5, %c0_6, %c0_7], %19 {strides = array<i32>} : memref<1x8x16x128xbf16, #tpu.memory_space<vmem>>, vector<1x8x16x128xbf16>,
    %cst_8 = arith.constant dense<0.000000e+00> : vector<128xf32>
    %21 = vector.multi_reduction <add>, %17, %cst_8 [0] : vector<128x128xf32> to vector<128xf32>
    %22 = vector.shape_cast %21 : vector<128xf32> to vector<1x1x1x128xf32>
    %c0_9 = arith.constant 0 : index
    %c0_10 = arith.constant 0 : index
    %c0_11 = arith.constant 0 : index
    %c0_12 = arith.constant 0 : index
    %23 = vector.load %arg5[%c0_9, %c0_10, %c0_11, %c0_12] : memref<1x1x1x128xf32, #tpu.memory_space<vmem>>, vector<1x1x1x128xf32>
    tpu.vector_store %arg5[%c0_9, %c0_10, %c0_11, %c0_12], %22 {strides = array<i32>} : memref<1x1x1x128xf32, #tpu.memory_space<vmem>>, vector<1x1x1x128xf32>,
    %24 = arith.mulf %17, %17 : vector<128x128xf32>
    %cst_13 = arith.constant dense<0.000000e+00> : vector<128xf32>
    %25 = vector.multi_reduction <add>, %24, %cst_13 [0] : vector<128x128xf32> to vector<128xf32>
    %26 = vector.shape_cast %25 : vector<128xf32> to vector<1x1x1x128xf32>
    %c0_14 = arith.constant 0 : index
    %c0_15 = arith.constant 0 : index
    %c0_16 = arith.constant 0 : index
    %c0_17 = arith.constant 0 : index
    %27 = vector.load %arg6[%c0_14, %c0_15, %c0_16, %c0_17] : memref<1x1x1x128xf32, #tpu.memory_space<vmem>>, vector<1x1x1x128xf32>
    tpu.vector_store %arg6[%c0_14, %c0_15, %c0_16, %c0_17], %26 {strides = array<i32>} : memref<1x1x1x128xf32, #tpu.memory_space<vmem>>, vector<1x1x1x128xf32>,
    return
  }
  func.func @transform_0(%arg0: i32, %arg1: i32) -> (i32, i32, i32, i32) {
    %c0_i32 = arith.constant 0 : i32
    %c0_i32_0 = arith.constant 0 : i32
    %c0_i32_1 = arith.constant 0 : i32
    %c0_i32_2 = arith.constant 0 : i32
    return %arg0, %c0_i32, %c0_i32_0, %c0_i32_1 : i32, i32, i32, i32
  }
  func.func @transform_1(%arg0: i32, %arg1: i32) -> (i32, i32) {
    %c0_i32 = arith.constant 0 : i32
    %c0_i32_0 = arith.constant 0 : i32
    %c0_i32_1 = arith.constant 0 : i32
    return %c0_i32, %c0_i32_0 : i32, i32
  }
  func.func @transform_2(%arg0: i32, %arg1: i32) -> (i32, i32, i32, i32) {
    %c0_i32 = arith.constant 0 : i32
    %c0_i32_0 = arith.constant 0 : i32
    %c0_i32_1 = arith.constant 0 : i32
    return %arg0, %arg1, %c0_i32, %c0_i32_0 : i32, i32, i32, i32
  }
  func.func @transform_3(%arg0: i32, %arg1: i32) -> (i32, i32, i32, i32) {
    %c0_i32 = arith.constant 0 : i32
    %c0_i32_0 = arith.constant 0 : i32
    %c0_i32_1 = arith.constant 0 : i32
    return %arg0, %arg1, %c0_i32, %c0_i32_0 : i32, i32, i32, i32
  }
  func.func @transform_4(%arg0: i32, %arg1: i32) -> (i32, i32, i32, i32) {
    %c0_i32 = arith.constant 0 : i32
    %c0_i32_0 = arith.constant 0 : i32
    %c0_i32_1 = arith.constant 0 : i32
    return %arg0, %arg1, %c0_i32, %c0_i32_0 : i32, i32, i32, i32
  }
}

module attributes {stable_mosaic.version = 11 : i64} {
  func.func @_bn_relu_kernel(%arg0: i32, %arg1: i32, %arg2: memref<1x8x16x128xbf16, #tpu.memory_space<vmem>>, %arg3: memref<1x128xf32, #tpu.memory_space<vmem>>, %arg4: memref<1x128xf32, #tpu.memory_space<vmem>>, %arg5: memref<1x8x16x128xf32, #tpu.memory_space<vmem>>) attributes {dimension_semantics = [#tpu.dimension_semantics<parallel>, #tpu.dimension_semantics<parallel>], iteration_bounds = array<i64: 2, 2>, scalar_prefetch = 0 : i64, scratch_operands = 0 : i64, tpu.core_type = #tpu.core_type<tc>, window_params = [{transform_indices = @transform_0, window_bounds = array<i64: 1, 8, 16, 128>}, {pipeline_mode = #tpu.pipeline_mode<synchronous>, transform_indices = @transform_1, window_bounds = array<i64: 1, 128>}, {pipeline_mode = #tpu.pipeline_mode<synchronous>, transform_indices = @transform_2, window_bounds = array<i64: 1, 128>}, {transform_indices = @transform_3, window_bounds = array<i64: 1, 8, 16, 128>}]} {
    %c0 = arith.constant 0 : index
    %c0_0 = arith.constant 0 : index
    %c0_1 = arith.constant 0 : index
    %c0_2 = arith.constant 0 : index
    %0 = vector.load %arg2[%c0, %c0_0, %c0_1, %c0_2] : memref<1x8x16x128xbf16, #tpu.memory_space<vmem>>, vector<1x8x16x128xbf16>
    %1 = arith.extf %0 : vector<1x8x16x128xbf16> to vector<1x8x16x128xf32>
    %c0_3 = arith.constant 0 : index
    %c0_4 = arith.constant 0 : index
    %2 = vector.load %arg3[%c0_3, %c0_4] : memref<1x128xf32, #tpu.memory_space<vmem>>, vector<1x128xf32>
    %3 = vector.shape_cast %2 : vector<1x128xf32> to vector<1x1x1x128xf32>
    %4 = vector.broadcast %3 : vector<1x1x1x128xf32> to vector<1x8x16x128xf32>
    %5 = arith.mulf %1, %4 : vector<1x8x16x128xf32>
    %c0_5 = arith.constant 0 : index
    %c0_6 = arith.constant 0 : index
    %6 = vector.load %arg4[%c0_5, %c0_6] : memref<1x128xf32, #tpu.memory_space<vmem>>, vector<1x128xf32>
    %7 = vector.shape_cast %6 : vector<1x128xf32> to vector<1x1x1x128xf32>
    %8 = vector.broadcast %7 : vector<1x1x1x128xf32> to vector<1x8x16x128xf32>
    %9 = arith.addf %5, %8 : vector<1x8x16x128xf32>
    %cst = arith.constant 0.000000e+00 : f32
    %10 = vector.broadcast %cst : f32 to vector<1x8x16x128xf32>
    %11 = arith.maximumf %9, %10 : vector<1x8x16x128xf32>
    %c0_7 = arith.constant 0 : index
    %c0_8 = arith.constant 0 : index
    %c0_9 = arith.constant 0 : index
    %c0_10 = arith.constant 0 : index
    %12 = vector.load %arg5[%c0_7, %c0_8, %c0_9, %c0_10] : memref<1x8x16x128xf32, #tpu.memory_space<vmem>>, vector<1x8x16x128xf32>
    tpu.vector_store %arg5[%c0_7, %c0_8, %c0_9, %c0_10], %11 {strides = array<i32>} : memref<1x8x16x128xf32, #tpu.memory_space<vmem>>, vector<1x8x16x128xf32>,
    return
  }
  func.func @transform_0(%arg0: i32, %arg1: i32) -> (i32, i32, i32, i32) {
    %c0_i32 = arith.constant 0 : i32
    %c0_i32_0 = arith.constant 0 : i32
    %c0_i32_1 = arith.constant 0 : i32
    return %arg0, %arg1, %c0_i32, %c0_i32_0 : i32, i32, i32, i32
  }
  func.func @transform_1(%arg0: i32, %arg1: i32) -> (i32, i32) {
    %c0_i32 = arith.constant 0 : i32
    %c0_i32_0 = arith.constant 0 : i32
    %c0_i32_1 = arith.constant 0 : i32
    return %c0_i32, %c0_i32_0 : i32, i32
  }
  func.func @transform_2(%arg0: i32, %arg1: i32) -> (i32, i32) {
    %c0_i32 = arith.constant 0 : i32
    %c0_i32_0 = arith.constant 0 : i32
    %c0_i32_1 = arith.constant 0 : i32
    return %c0_i32, %c0_i32_0 : i32, i32
  }
  func.func @transform_3(%arg0: i32, %arg1: i32) -> (i32, i32, i32, i32) {
    %c0_i32 = arith.constant 0 : i32
    %c0_i32_0 = arith.constant 0 : i32
    %c0_i32_1 = arith.constant 0 : i32
    return %arg0, %arg1, %c0_i32, %c0_i32_0 : i32, i32, i32, i32
  }
}

</mosaic_0001>

<llo_original>
// kernel: basic_conv2d.3
$region0: #{basic_conv2d.3}
  #allocation0 [shape = 'u32[]', space=smem, size = 0x4, offset = 0x4, fixed_abs, tag = 'smem constant byte address 0x4 - core index']
  #allocation1 [shape = 'u32[144,128]{1,0:T(1,128)}', space=vmem, size = 0x12000, scoped, tag = 'internal scratch']
  %s0 = inlined_call_operand.vmem [shape: bf16[2,16,16,128], index: 0, kind: input, shape index: {}]
  %s1 = inlined_call_operand.vmem [shape: f32[1,128], index: 1, kind: input, shape index: {}]
  %s2 = inlined_call_operand.vmem [shape: f32[1,128], index: 2, kind: input, shape index: {}]
  %s3 = inlined_call_operand.vmem [shape: f32[2,16,16,128], index: 3, kind: output, shape index: {}]
  %s4 = sld [smem:[#allocation0]]
  $region45: #{basic_conv2d.3} parent=0
    _
  %s6 = ssub.s32 1, %s4
  %s7 = scalar_select 0, %s6, %s4
  loop: start=0, step=1, limit=6
  $region2: #{basic_conv2d.3} parent=0 // loop_pre_header
    _
  $region3: #{basic_conv2d.3} parent=0 // loop_header
    %s9 = sphi 0, %s13
    %p10 = scmp.ge.s32.totalorder %s9, 6
    %s16 = sphi 0, %s28
    %s17 = sphi 0, %s24
    %s18 = sphi 0, %s16
    %s19 = sphi 0, %s17
    %s20 = sphi 0, %s18
    %s21 = sphi 0, %s19
    %s33 = sphi 0, %s35
    %s36 = sphi 0, %s33
    %s37 = sphi 0, %s36
    %s53 = sphi 0, %s37
    %s57 = sphi 0, %s57
    %s59 = sphi 0, %s57
    %s60 = sphi 0, %s59
    %s74 = sphi 0, %s60
    %s78 = sphi 0, %s78
    %s80 = sphi 0, %s78
    %s81 = sphi 0, %s80
    %s95 = sphi 0, %s81
    %s103 = sphi 0, %s105
    %s106 = sphi 0, %s103
    %s107 = sphi 0, %s106
    %s123 = sphi 0, %s107
  $region4: #{basic_conv2d.3} parent=0 // loop_header_branch
    %12 = sbr.rel (%p10) target = $region8
  $region5: #{basic_conv2d.3} parent=0 // loop_body
    %s14 = ssub.s32 %s9, 1
    %s15 = ssub.s32 %s9, 2
    %s22 = sadd.s32 1, %s17
    %p23 = scmp.ge.s32.totalorder %s22, 2
    %s24 = scalar_select %p23, 0, %s22
    %s25 = sadd.s32 1, %s16
    %s26 = scalar_select %p23, %s25, %s16
    %p27 = scmp.ge.s32.totalorder %s26, 2
    %s28 = scalar_select %p27, 0, %s26
    %s29 = ssub.s32 %s16, %s28
    %s30 = ssub.s32 %s17, %s24
    %s31 = sor.u32 %s29, %s30
    %p32 = scmp.eq.s32.totalorder %s31, 0
    %s34 = sadd.s32 %s33, 1
    %s35 = scalar_select %p32, %s33, %s34
    %p38 = pneg %p32
    %p39 = scmp.eq.s32.totalorder %s9, 3
    %p40 = por %p38, %p39
    %p41 = scmp.ne.s32.totalorder %s33, %s36
    %p42 = scmp.eq.s32.totalorder %s9, 0
    %p43 = por %p41, %p42
    %p44 = scmp.ne.s32.totalorder %s33, %s36
    %p45 = scmp.eq.s32.totalorder %s14, 3
    %p46 = por %p44, %p45
    %p47 = scmp.ne.s32.totalorder %s36, %s37
    %p48 = scmp.eq.s32.totalorder %s14, 0
    %p49 = por %p47, %p48
    %p50 = scmp.ne.s32.totalorder %s36, %s37
    %p51 = scmp.eq.s32.totalorder %s15, 3
    %p52 = por %p50, %p51
    %p54 = scmp.ne.s32.totalorder %s37, %s53
    %p55 = scmp.eq.s32.totalorder %s15, 0
    %p56 = por %p54, %p55
    %s58 = sadd.s32 %s57, 1
    %p61 = scmp.eq.s32.totalorder %s9, 3
    %p62 = scmp.ne.s32.totalorder %s57, %s59
    %p63 = scmp.eq.s32.totalorder %s9, 0
    %p64 = por %p62, %p63
    %p65 = scmp.ne.s32.totalorder %s57, %s59
    %p66 = scmp.eq.s32.totalorder %s14, 3
    %p67 = por %p65, %p66
    %p68 = scmp.ne.s32.totalorder %s59, %s60
    %p69 = scmp.eq.s32.totalorder %s14, 0
    %p70 = por %p68, %p69
    %p71 = scmp.ne.s32.totalorder %s59, %s60
    %p72 = scmp.eq.s32.totalorder %s15, 3
    %p73 = por %p71, %p72
    %p75 = scmp.ne.s32.totalorder %s60, %s74
    %p76 = scmp.eq.s32.totalorder %s15, 0
    %p77 = por %p75, %p76
    %s79 = sadd.s32 %s78, 1
    %p82 = scmp.eq.s32.totalorder %s9, 3
    %p83 = scmp.ne.s32.totalorder %s78, %s80
    %p84 = scmp.eq.s32.totalorder %s9, 0
    %p85 = por %p83, %p84
    %p86 = scmp.ne.s32.totalorder %s78, %s80
    %p87 = scmp.eq.s32.totalorder %s14, 3
    %p88 = por %p86, %p87
    %p89 = scmp.ne.s32.totalorder %s80, %s81
    %p90 = scmp.eq.s32.totalorder %s14, 0
    %p91 = por %p89, %p90
    %p92 = scmp.ne.s32.totalorder %s80, %s81
    %p93 = scmp.eq.s32.totalorder %s15, 3
    %p94 = por %p92, %p93
    %p96 = scmp.ne.s32.totalorder %s81, %s95
    %p97 = scmp.eq.s32.totalorder %s15, 0
    %p98 = por %p96, %p97
    %s99 = ssub.s32 %s16, %s28
    %s100 = ssub.s32 %s17, %s24
    %s101 = sor.u32 %s99, %s100
    %p102 = scmp.eq.s32.totalorder %s101, 0
    %s104 = sadd.s32 %s103, 1
    %s105 = scalar_select %p102, %s103, %s104
    %p108 = pneg %p102
    %p109 = scmp.eq.s32.totalorder %s9, 3
    %p110 = por %p108, %p109
    %p111 = scmp.ne.s32.totalorder %s103, %s106
    %p112 = scmp.eq.s32.totalorder %s9, 0
    %p113 = por %p111, %p112
    %p114 = scmp.ne.s32.totalorder %s103, %s106
    %p115 = scmp.eq.s32.totalorder %s14, 3
    %p116 = por %p114, %p115
    %p117 = scmp.ne.s32.totalorder %s106, %s107
    %p118 = scmp.eq.s32.totalorder %s14, 0
    %p119 = por %p117, %p118
    %p120 = scmp.ne.s32.totalorder %s106, %s107
    %p121 = scmp.eq.s32.totalorder %s15, 3
    %p122 = por %p120, %p121
    %p124 = scmp.ne.s32.totalorder %s107, %s123
    %p125 = scmp.eq.s32.totalorder %s15, 0
    %p126 = por %p124, %p125
    %p127 = scmp.le.s32.totalorder 1, %s9
    %p128 = scmp.lt.s32.totalorder %s9, 5
    %p129 = pnand %p127, %p128
    %p130 = pneg %p129
    // Predicated region
    $region9: #{basic_conv2d.3} parent=5 // pred_check
      _
    $region10: #{basic_conv2d.3} parent=5 // pred_check_branch
      %132 = sbr.rel (%p129) target = $region12
    $region11: #{basic_conv2d.3} parent=5 // pred_region
      %s133 = ssub.s32 %s9, 1
      // Predicated region
      $region13: #{basic_conv2d.3} parent=11 // pred_check
        %p134 = pneg %p70
      $region14: #{basic_conv2d.3} parent=11 // pred_check_branch
        %136 = sbr.rel (%p134) target = $region16
      $region15: #{basic_conv2d.3} parent=11 // pred_region
        _
      $region16: #{basic_conv2d.3} parent=11 // pred_fallthru
        _
      // Predicated region
      $region17: #{basic_conv2d.3} parent=11 // pred_check
        %p137 = pneg %p91
      $region18: #{basic_conv2d.3} parent=11 // pred_check_branch
        %139 = sbr.rel (%p137) target = $region20
      $region19: #{basic_conv2d.3} parent=11 // pred_region
        _
      $region20: #{basic_conv2d.3} parent=11 // pred_fallthru
        _
    $region12: #{basic_conv2d.3} parent=5 // pred_fallthru
      _
    %p140 = scmp.lt.s32.totalorder %s9, 4
    // Predicated region
    $region21: #{basic_conv2d.3} parent=5 // pred_check
      %p141 = pneg %p140
    $region22: #{basic_conv2d.3} parent=5 // pred_check_branch
      %143 = sbr.rel (%p141) target = $region24
    $region23: #{basic_conv2d.3} parent=5 // pred_region
      // Predicated region
      $region25: #{basic_conv2d.3} parent=23 // pred_check
        %p144 = pneg %p43
      $region26: #{basic_conv2d.3} parent=23 // pred_check_branch
        %146 = sbr.rel (%p144) target = $region28
      $region27: #{basic_conv2d.3} parent=23 // pred_region
        %s147 = smul.u32 8, %s17
        %p148 = scmp.lt.s32.totalorder %s16, 1
        %s149 = scalar_select %p148, %s16, 1
        %p150 = scmp.lt.s32.totalorder %s147, 15
        %s151 = scalar_select %p150, %s147, 15
        %s152 = smul.addr %s151, 2
        %s153 = smul.addr %s149, 32
        %s154 = sadd.s32 %s152, %s153
        %s155 = smul.addr %s154, 4
        %s156 = scalar_lea.vmem %s0, %s155
        %s157 = smul.u32 8, %s17
      $region28: #{basic_conv2d.3} parent=23 // pred_fallthru
        _
    $region24: #{basic_conv2d.3} parent=5 // pred_fallthru
      _
    %p158 = scmp.le.s32.totalorder 1, %s9
    %p159 = scmp.lt.s32.totalorder %s9, 5
    %p160 = pnand %p158, %p159
    %p161 = pneg %p160
    // Predicated region
    $region29: #{basic_conv2d.3} parent=5 // pred_check
      _
    $region30: #{basic_conv2d.3} parent=5 // pred_check_branch
      %163 = sbr.rel (%p160) target = $region32
    $region31: #{basic_conv2d.3} parent=5 // pred_region
      %s164 = ssub.s32 %s9, 1
      %s165 = smul.u32 8, %s19
      %p166 = scmp.lt.s32.totalorder %s18, 1
      %s167 = scalar_select %p166, %s18, 1
      %p168 = scmp.lt.s32.totalorder %s165, 15
      %s169 = scalar_select %p168, %s165, 15
      %s170 = smul.addr %s169, 2
      %s171 = smul.addr %s167, 32
      %s172 = sadd.s32 %s170, %s171
      %s173 = smul.addr %s172, 4
      %s174 = scalar_lea.vmem %s0, %s173
      %p175 = pneg %p49
      %p176 = pneg %p46
      %p177 = pneg %p70
      %p178 = pneg %p67
      %p179 = pneg %p91
      %p180 = pneg %p88
      %p181 = pneg %p119
      %p182 = pneg %p116
      %s183 = smul.u32 8, %s19
      %p184 = scmp.lt.s32.totalorder %s18, 1
      %s185 = scalar_select %p184, %s18, 1
      %p186 = scmp.lt.s32.totalorder %s183, 15
      %s187 = scalar_select %p186, %s183, 15
      %s188 = smul.addr %s187, 2
      %s189 = smul.addr %s185, 32
      %s190 = sadd.s32 %s188, %s189
      %s191 = smul.addr %s190, 8
      %s192 = scalar_lea.vmem %s3, %s191
      %s193 = smul.u32 8, %s19
      %p194 = scmp.lt.s32.totalorder %s18, 1
      %s195 = scalar_select %p194, %s18, 1
      %p196 = scmp.lt.s32.totalorder %s193, 15
      %s197 = scalar_select %p196, %s193, 15
      %s198 = smul.addr %s197, 2
      %s199 = smul.addr %s195, 32
      %s200 = sadd.s32 %s198, %s199
      %s201 = smul.addr %s200, 4
      %s202 = scalar_lea.vmem %s0, %s201
      %s203 = smul.u32 8, %s19
      %s204 = smul.u32 8, %s19
      %p205 = scmp.lt.s32.totalorder %s18, 1
      %s206 = scalar_select %p205, %s18, 1
      %p207 = scmp.lt.s32.totalorder %s204, 15
      %s208 = scalar_select %p207, %s204, 15
      %s209 = smul.addr %s208, 2
      %s210 = smul.addr %s206, 32
      %s211 = sadd.s32 %s209, %s210
      %s212 = smul.addr %s211, 8
      %s213 = scalar_lea.vmem %s3, %s212
      %s214 = smul.u32 8, %s19
      %v215 = vld [vmem:[%s202] sm:$0xf]
      %v216 = vld [vmem:[%s202 + $0x4] sm:$0xf]
      %v217 = vld [vmem:[%s202 + $0x8] sm:$0xf]
      %v218 = vld [vmem:[%s202 + $0xc] sm:$0xf]
      %v219 = vld [vmem:[%s202 + $0x10] sm:$0xf]
      %v220 = vld [vmem:[%s202 + $0x14] sm:$0xf]
      %v221 = vld [vmem:[%s202 + $0x18] sm:$0xf]
      %v222 = vld [vmem:[%s202 + $0x1c] sm:$0xf]
      %v223 = vld [vmem:[%s202 + $0x20] sm:$0xf]
      %v224 = vld [vmem:[%s202 + $0x24] sm:$0xf]
      %v225 = vld [vmem:[%s202 + $0x28] sm:$0xf]
      %v226 = vld [vmem:[%s202 + $0x2c] sm:$0xf]
      %v227 = vld [vmem:[%s202 + $0x30] sm:$0xf]
      %v228 = vld [vmem:[%s202 + $0x34] sm:$0xf]
      %v229 = vld [vmem:[%s202 + $0x38] sm:$0xf]
      %v230 = vld [vmem:[%s202 + $0x3c] sm:$0xf]
      %v231 = vunpack.c.l.bf16 %v215
      %v232 = vunpack.c.l.bf16 %v216
      %v233 = vunpack.c.l.bf16 %v217
      %v234 = vunpack.c.l.bf16 %v218
      %v235 = vunpack.c.l.bf16 %v219
      %v236 = vunpack.c.l.bf16 %v220
      %v237 = vunpack.c.l.bf16 %v221
      %v238 = vunpack.c.l.bf16 %v222
      %v239 = vunpack.c.l.bf16 %v223
      %v240 = vunpack.c.l.bf16 %v224
      %v241 = vunpack.c.l.bf16 %v225
      %v242 = vunpack.c.l.bf16 %v226
      %v243 = vunpack.c.l.bf16 %v227
      %v244 = vunpack.c.l.bf16 %v228
      %v245 = vunpack.c.l.bf16 %v229
      %v246 = vunpack.c.l.bf16 %v230
      %v247 = vld [vmem:[%s1] sm:$0x1]
      %v249 = vlaneseq
      %v250 = vshrl.u32 %v249, 7
      %v251 = vsub.s32 0, %v250
      %v252 = vrot.slane %v247, %v251
      %v254 = vmul.f32 %v231, %v252
      %v255 = vmul.f32 %v232, %v252
      %v256 = vmul.f32 %v233, %v252
      %v257 = vmul.f32 %v234, %v252
      %v258 = vmul.f32 %v235, %v252
      %v259 = vmul.f32 %v236, %v252
      %v260 = vmul.f32 %v237, %v252
      %v261 = vmul.f32 %v238, %v252
      %v262 = vmul.f32 %v239, %v252
      %v263 = vmul.f32 %v240, %v252
      %v264 = vmul.f32 %v241, %v252
      %v265 = vmul.f32 %v242, %v252
      %v266 = vmul.f32 %v243, %v252
      %v267 = vmul.f32 %v244, %v252
      %v268 = vmul.f32 %v245, %v252
      %v269 = vmul.f32 %v246, %v252
      %v270 = vld [vmem:[%s2] sm:$0x1]
      %v272 = vlaneseq
      %v273 = vshrl.u32 %v272, 7
      %v274 = vsub.s32 0, %v273
      %v275 = vrot.slane %v270, %v274
      %v277 = vadd.f32 %v254, %v275
      %v278 = vadd.f32 %v255, %v275
      %v279 = vadd.f32 %v256, %v275
      %v280 = vadd.f32 %v257, %v275
      %v281 = vadd.f32 %v258, %v275
      %v282 = vadd.f32 %v259, %v275
      %v283 = vadd.f32 %v260, %v275
      %v284 = vadd.f32 %v261, %v275
      %v285 = vadd.f32 %v262, %v275
      %v286 = vadd.f32 %v263, %v275
      %v287 = vadd.f32 %v264, %v275
      %v288 = vadd.f32 %v265, %v275
      %v289 = vadd.f32 %v266, %v275
      %v290 = vadd.f32 %v267, %v275
      %v291 = vadd.f32 %v268, %v275
      %v292 = vadd.f32 %v269, %v275
      %v293 = vmax.f32 %v277, 0.0
      %v294 = vmax.f32 %v278, 0.0
      %v295 = vmax.f32 %v279, 0.0
      %v296 = vmax.f32 %v280, 0.0
      %v297 = vmax.f32 %v281, 0.0
      %v298 = vmax.f32 %v282, 0.0
      %v299 = vmax.f32 %v283, 0.0
      %v300 = vmax.f32 %v284, 0.0
      %v301 = vmax.f32 %v285, 0.0
      %v302 = vmax.f32 %v286, 0.0
      %v303 = vmax.f32 %v287, 0.0
      %v304 = vmax.f32 %v288, 0.0
      %v305 = vmax.f32 %v289, 0.0
      %v306 = vmax.f32 %v290, 0.0
      %v307 = vmax.f32 %v291, 0.0
      %v308 = vmax.f32 %v292, 0.0
      %309 = vst [vmem:[%s213] sm:$0xff] %v293
      %310 = vst [vmem:[%s213 + $0x8] sm:$0xff] %v294
      %311 = vst [vmem:[%s213 + $0x10] sm:$0xff] %v295
      %312 = vst [vmem:[%s213 + $0x18] sm:$0xff] %v296
      %313 = vst [vmem:[%s213 + $0x20] sm:$0xff] %v297
      %314 = vst [vmem:[%s213 + $0x28] sm:$0xff] %v298
      %315 = vst [vmem:[%s213 + $0x30] sm:$0xff] %v299
      %316 = vst [vmem:[%s213 + $0x38] sm:$0xff] %v300
      %317 = vst [vmem:[%s213 + $0x40] sm:$0xff] %v301
      %318 = vst [vmem:[%s213 + $0x48] sm:$0xff] %v302
      %319 = vst [vmem:[%s213 + $0x50] sm:$0xff] %v303
      %320 = vst [vmem:[%s213 + $0x58] sm:$0xff] %v304
      %321 = vst [vmem:[%s213 + $0x60] sm:$0xff] %v305
      %322 = vst [vmem:[%s213 + $0x68] sm:$0xff] %v306
      %323 = vst [vmem:[%s213 + $0x70] sm:$0xff] %v307
      %324 = vst [vmem:[%s213 + $0x78] sm:$0xff] %v308
      %s325 = smul.u32 8, %s19
      %p326 = scmp.lt.s32.totalorder %s18, 1
      %s327 = scalar_select %p326, %s18, 1
      %p328 = scmp.lt.s32.totalorder %s325, 15
      %s329 = scalar_select %p328, %s325, 15
      %s330 = smul.addr %s329, 2
      %s331 = smul.addr %s327, 32
      %s332 = sadd.s32 %s330, %s331
      %s333 = smul.addr %s332, 8
      %s334 = scalar_lea.vmem %s3, %s333
      // Predicated region
      $region33: #{basic_conv2d.3} parent=31 // pred_check
        %p335 = pneg %p116
      $region34: #{basic_conv2d.3} parent=31 // pred_check_branch
        %337 = sbr.rel (%p335) target = $region36
      $region35: #{basic_conv2d.3} parent=31 // pred_region
        %s338 = smul.u32 8, %s19
      $region36: #{basic_conv2d.3} parent=31 // pred_fallthru
        _
    $region32: #{basic_conv2d.3} parent=5 // pred_fallthru
      _
    %p339 = scmp.le.s32.totalorder 2, %s9
    // Predicated region
    $region37: #{basic_conv2d.3} parent=5 // pred_check
      %p340 = pneg %p339
    $region38: #{basic_conv2d.3} parent=5 // pred_check_branch
      %342 = sbr.rel (%p340) target = $region40
    $region39: #{basic_conv2d.3} parent=5 // pred_region
      %s343 = ssub.s32 %s9, 2
      // Predicated region
      $region41: #{basic_conv2d.3} parent=39 // pred_check
        %p344 = pneg %p122
      $region42: #{basic_conv2d.3} parent=39 // pred_check_branch
        %346 = sbr.rel (%p344) target = $region44
      $region43: #{basic_conv2d.3} parent=39 // pred_region
        %s347 = smul.u32 8, %s21
        %p348 = scmp.lt.s32.totalorder %s20, 1
        %s349 = scalar_select %p348, %s20, 1
        %p350 = scmp.lt.s32.totalorder %s347, 15
        %s351 = scalar_select %p350, %s347, 15
        %s352 = smul.addr %s351, 2
        %s353 = smul.addr %s349, 32
        %s354 = sadd.s32 %s352, %s353
        %s355 = smul.addr %s354, 8
        %s356 = scalar_lea.vmem %s3, %s355
      $region44: #{basic_conv2d.3} parent=39 // pred_fallthru
        _
    $region40: #{basic_conv2d.3} parent=5 // pred_fallthru
      _
  $region6: #{basic_conv2d.3} parent=0 // loop_footer
    %s13 = sadd.s32 1, %s9
  $region7: #{basic_conv2d.3} parent=0 // loop_footer_branch
    %8 = sbr.rel target = $region3
  $region8: #{basic_conv2d.3} parent=0 // loop_exit
    _

// kernel: basic_conv2d.2
$region0: #{basic_conv2d.2}
  #allocation0 [shape = 'u32[]', space=smem, size = 0x4, offset = 0x4, fixed_abs, tag = 'smem constant byte address 0x4 - core index']
  #allocation1 [shape = 'u32[144,128]{1,0:T(1,128)}', space=vmem, size = 0x12000, scoped, tag = 'internal scratch']
  %s0 = inlined_call_operand.vmem [shape: bf16[2,18,18,4], index: 0, kind: input, shape index: {}]
  %s1 = inlined_call_operand.vmem [shape: bf16[36,128], index: 1, kind: input, shape index: {}]
  %s2 = inlined_call_operand.vmem [shape: bf16[2,16,16,128], index: 2, kind: output, shape index: {0}]
  %s3 = inlined_call_operand.vmem [shape: f32[2,2,1,128], index: 3, kind: output, shape index: {1}]
  %s4 = inlined_call_operand.vmem [shape: f32[2,2,1,128], index: 4, kind: output, shape index: {2}]
  %5 = xla_tuple %s2, %s3, %s4
  %s6 = sld [smem:[#allocation0]]
  $region57: #{basic_conv2d.2} parent=0
    _
  %s8 = ssub.s32 1, %s6
  %s9 = scalar_select 0, %s8, %s6
  loop: start=0, step=1, limit=6
  $region2: #{basic_conv2d.2} parent=0 // loop_pre_header
    _
  $region3: #{basic_conv2d.2} parent=0 // loop_header
    %s11 = sphi 0, %s15
    %p12 = scmp.ge.s32.totalorder %s11, 6
    %s18 = sphi 0, %s30
    %s19 = sphi 0, %s26
    %s20 = sphi 0, %s18
    %s21 = sphi 0, %s19
    %s22 = sphi 0, %s20
    %s23 = sphi 0, %s21
    %s33 = sphi 0, %s35
    %s36 = sphi 0, %s33
    %s37 = sphi 0, %s36
    %s53 = sphi 0, %s37
    %s57 = sphi 0, %s57
    %s59 = sphi 0, %s57
    %s60 = sphi 0, %s59
    %s74 = sphi 0, %s60
    %s82 = sphi 0, %s84
    %s85 = sphi 0, %s82
    %s86 = sphi 0, %s85
    %s102 = sphi 0, %s86
    %s110 = sphi 0, %s112
    %s113 = sphi 0, %s110
    %s114 = sphi 0, %s113
    %s130 = sphi 0, %s114
    %s138 = sphi 0, %s140
    %s141 = sphi 0, %s138
    %s142 = sphi 0, %s141
    %s158 = sphi 0, %s142
  $region4: #{basic_conv2d.2} parent=0 // loop_header_branch
    %14 = sbr.rel (%p12) target = $region8
  $region5: #{basic_conv2d.2} parent=0 // loop_body
    %s16 = ssub.s32 %s11, 1
    %s17 = ssub.s32 %s11, 2
    %s24 = sadd.s32 1, %s19
    %p25 = scmp.ge.s32.totalorder %s24, 2
    %s26 = scalar_select %p25, 0, %s24
    %s27 = sadd.s32 1, %s18
    %s28 = scalar_select %p25, %s27, %s18
    %p29 = scmp.ge.s32.totalorder %s28, 2
    %s30 = scalar_select %p29, 0, %s28
    %s31 = ssub.s32 %s18, %s30
    %p32 = scmp.eq.s32.totalorder %s31, 0
    %s34 = sadd.s32 %s33, 1
    %s35 = scalar_select %p32, %s33, %s34
    %p38 = pneg %p32
    %p39 = scmp.eq.s32.totalorder %s11, 3
    %p40 = por %p38, %p39
    %p41 = scmp.ne.s32.totalorder %s33, %s36
    %p42 = scmp.eq.s32.totalorder %s11, 0
    %p43 = por %p41, %p42
    %p44 = scmp.ne.s32.totalorder %s33, %s36
    %p45 = scmp.eq.s32.totalorder %s16, 3
    %p46 = por %p44, %p45
    %p47 = scmp.ne.s32.totalorder %s36, %s37
    %p48 = scmp.eq.s32.totalorder %s16, 0
    %p49 = por %p47, %p48
    %p50 = scmp.ne.s32.totalorder %s36, %s37
    %p51 = scmp.eq.s32.totalorder %s17, 3
    %p52 = por %p50, %p51
    %p54 = scmp.ne.s32.totalorder %s37, %s53
    %p55 = scmp.eq.s32.totalorder %s17, 0
    %p56 = por %p54, %p55
    %s58 = sadd.s32 %s57, 1
    %p61 = scmp.eq.s32.totalorder %s11, 3
    %p62 = scmp.ne.s32.totalorder %s57, %s59
    %p63 = scmp.eq.s32.totalorder %s11, 0
    %p64 = por %p62, %p63
    %p65 = scmp.ne.s32.totalorder %s57, %s59
    %p66 = scmp.eq.s32.totalorder %s16, 3
    %p67 = por %p65, %p66
    %p68 = scmp.ne.s32.totalorder %s59, %s60
    %p69 = scmp.eq.s32.totalorder %s16, 0
    %p70 = por %p68, %p69
    %p71 = scmp.ne.s32.totalorder %s59, %s60
    %p72 = scmp.eq.s32.totalorder %s17, 3
    %p73 = por %p71, %p72
    %p75 = scmp.ne.s32.totalorder %s60, %s74
    %p76 = scmp.eq.s32.totalorder %s17, 0
    %p77 = por %p75, %p76
    %s78 = ssub.s32 %s18, %s30
    %s79 = ssub.s32 %s19, %s26
    %s80 = sor.u32 %s78, %s79
    %p81 = scmp.eq.s32.totalorder %s80, 0
    %s83 = sadd.s32 %s82, 1
    %s84 = scalar_select %p81, %s82, %s83
    %p87 = pneg %p81
    %p88 = scmp.eq.s32.totalorder %s11, 3
    %p89 = por %p87, %p88
    %p90 = scmp.ne.s32.totalorder %s82, %s85
    %p91 = scmp.eq.s32.totalorder %s11, 0
    %p92 = por %p90, %p91
    %p93 = scmp.ne.s32.totalorder %s82, %s85
    %p94 = scmp.eq.s32.totalorder %s16, 3
    %p95 = por %p93, %p94
    %p96 = scmp.ne.s32.totalorder %s85, %s86
    %p97 = scmp.eq.s32.totalorder %s16, 0
    %p98 = por %p96, %p97
    %p99 = scmp.ne.s32.totalorder %s85, %s86
    %p100 = scmp.eq.s32.totalorder %s17, 3
    %p101 = por %p99, %p100
    %p103 = scmp.ne.s32.totalorder %s86, %s102
    %p104 = scmp.eq.s32.totalorder %s17, 0
    %p105 = por %p103, %p104
    %s106 = ssub.s32 %s18, %s30
    %s107 = ssub.s32 %s19, %s26
    %s108 = sor.u32 %s106, %s107
    %p109 = scmp.eq.s32.totalorder %s108, 0
    %s111 = sadd.s32 %s110, 1
    %s112 = scalar_select %p109, %s110, %s111
    %p115 = pneg %p109
    %p116 = scmp.eq.s32.totalorder %s11, 3
    %p117 = por %p115, %p116
    %p118 = scmp.ne.s32.totalorder %s110, %s113
    %p119 = scmp.eq.s32.totalorder %s11, 0
    %p120 = por %p118, %p119
    %p121 = scmp.ne.s32.totalorder %s110, %s113
    %p122 = scmp.eq.s32.totalorder %s16, 3
    %p123 = por %p121, %p122
    %p124 = scmp.ne.s32.totalorder %s113, %s114
    %p125 = scmp.eq.s32.totalorder %s16, 0
    %p126 = por %p124, %p125
    %p127 = scmp.ne.s32.totalorder %s113, %s114
    %p128 = scmp.eq.s32.totalorder %s17, 3
    %p129 = por %p127, %p128
    %p131 = scmp.ne.s32.totalorder %s114, %s130
    %p132 = scmp.eq.s32.totalorder %s17, 0
    %p133 = por %p131, %p132
    %s134 = ssub.s32 %s18, %s30
    %s135 = ssub.s32 %s19, %s26
    %s136 = sor.u32 %s134, %s135
    %p137 = scmp.eq.s32.totalorder %s136, 0
    %s139 = sadd.s32 %s138, 1
    %s140 = scalar_select %p137, %s138, %s139
    %p143 = pneg %p137
    %p144 = scmp.eq.s32.totalorder %s11, 3
    %p145 = por %p143, %p144
    %p146 = scmp.ne.s32.totalorder %s138, %s141
    %p147 = scmp.eq.s32.totalorder %s11, 0
    %p148 = por %p146, %p147
    %p149 = scmp.ne.s32.totalorder %s138, %s141
    %p150 = scmp.eq.s32.totalorder %s16, 3
    %p151 = por %p149, %p150
    %p152 = scmp.ne.s32.totalorder %s141, %s142
    %p153 = scmp.eq.s32.totalorder %s16, 0
    %p154 = por %p152, %p153
    %p155 = scmp.ne.s32.totalorder %s141, %s142
    %p156 = scmp.eq.s32.totalorder %s17, 3
    %p157 = por %p155, %p156
    %p159 = scmp.ne.s32.totalorder %s142, %s158
    %p160 = scmp.eq.s32.totalorder %s17, 0
    %p161 = por %p159, %p160
    %p162 = scmp.le.s32.totalorder 1, %s11
    %p163 = scmp.lt.s32.totalorder %s11, 5
    %p164 = pnand %p162, %p163
    %p165 = pneg %p164
    // Predicated region
    $region9: #{basic_conv2d.2} parent=5 // pred_check
      _
    $region10: #{basic_conv2d.2} parent=5 // pred_check_branch
      %167 = sbr.rel (%p164) target = $region12
    $region11: #{basic_conv2d.2} parent=5 // pred_region
      %s168 = ssub.s32 %s11, 1
      // Predicated region
      $region13: #{basic_conv2d.2} parent=11 // pred_check
        %p169 = pneg %p70
      $region14: #{basic_conv2d.2} parent=11 // pred_check_branch
        %171 = sbr.rel (%p169) target = $region16
      $region15: #{basic_conv2d.2} parent=11 // pred_region
        _
      $region16: #{basic_conv2d.2} parent=11 // pred_fallthru
        _
    $region12: #{basic_conv2d.2} parent=5 // pred_fallthru
      _
    %p172 = scmp.lt.s32.totalorder %s11, 4
    // Predicated region
    $region17: #{basic_conv2d.2} parent=5 // pred_check
      %p173 = pneg %p172
    $region18: #{basic_conv2d.2} parent=5 // pred_check_branch
      %175 = sbr.rel (%p173) target = $region20
    $region19: #{basic_conv2d.2} parent=5 // pred_region
      // Predicated region
      $region21: #{basic_conv2d.2} parent=19 // pred_check
        %p176 = pneg %p43
      $region22: #{basic_conv2d.2} parent=19 // pred_check_branch
        %178 = sbr.rel (%p176) target = $region24
      $region23: #{basic_conv2d.2} parent=19 // pred_region
        %p179 = scmp.lt.s32.totalorder %s18, 1
        %s180 = scalar_select %p179, %s18, 1
        %s181 = smul.addr %s180, 54
        %s182 = smul.addr %s181, 4
        %s183 = scalar_lea.vmem %s0, %s182
      $region24: #{basic_conv2d.2} parent=19 // pred_fallthru
        _
    $region20: #{basic_conv2d.2} parent=5 // pred_fallthru
      _
    %p184 = scmp.le.s32.totalorder 1, %s11
    %p185 = scmp.lt.s32.totalorder %s11, 5
    %p186 = pnand %p184, %p185
    %p187 = pneg %p186
    // Predicated region
    $region25: #{basic_conv2d.2} parent=5 // pred_check
      _
    $region26: #{basic_conv2d.2} parent=5 // pred_check_branch
      %189 = sbr.rel (%p186) target = $region28
    $region27: #{basic_conv2d.2} parent=5 // pred_region
      %s190 = ssub.s32 %s11, 1
      %p191 = scmp.lt.s32.totalorder %s20, 1
      %s192 = scalar_select %p191, %s20, 1
      %s193 = smul.addr %s192, 54
      %s194 = smul.addr %s193, 4
      %s195 = scalar_lea.vmem %s0, %s194
      %p196 = pneg %p49
      %p197 = pneg %p46
      %p198 = pneg %p70
      %p199 = pneg %p67
      %p200 = pneg %p98
      %p201 = pneg %p95
      %s202 = smul.u32 8, %s21
      %p203 = scmp.lt.s32.totalorder %s20, 1
      %s204 = scalar_select %p203, %s20, 1
      %p205 = scmp.lt.s32.totalorder %s202, 15
      %s206 = scalar_select %p205, %s202, 15
      %s207 = smul.addr %s206, 2
      %s208 = smul.addr %s204, 32
      %s209 = sadd.s32 %s207, %s208
      %s210 = smul.addr %s209, 4
      %s211 = scalar_lea.vmem %s2, %s210
      %p212 = pneg %p126
      %p213 = pneg %p123
      %p214 = scmp.lt.s32.totalorder %s20, 1
      %s215 = scalar_select %p214, %s20, 1
      %p216 = scmp.lt.s32.totalorder %s21, 1
      %s217 = scalar_select %p216, %s21, 1
      %s218 = smul.addr %s215, 2
      %s219 = sadd.s32 %s217, %s218
      %s220 = scalar_lea.vmem %s3, %s219
      %p221 = pneg %p154
      %p222 = pneg %p151
      %p223 = scmp.lt.s32.totalorder %s20, 1
      %s224 = scalar_select %p223, %s20, 1
      %p225 = scmp.lt.s32.totalorder %s21, 1
      %s226 = scalar_select %p225, %s21, 1
      %s227 = smul.addr %s224, 2
      %s228 = sadd.s32 %s226, %s227
      %s229 = scalar_lea.vmem %s4, %s228
      %p230 = scmp.lt.s32.totalorder %s20, 1
      %s231 = scalar_select %p230, %s20, 1
      %s232 = smul.addr %s231, 54
      %s233 = smul.addr %s232, 4
      %s234 = scalar_lea.vmem %s0, %s233
      %s235 = smul.u32 8, %s21
      %p236 = scmp.lt.s32.totalorder %s20, 1
      %s237 = scalar_select %p236, %s20, 1
      %p238 = scmp.lt.s32.totalorder %s235, 15
      %s239 = scalar_select %p238, %s235, 15
      %s240 = smul.addr %s239, 2
      %s241 = smul.addr %s237, 32
      %s242 = sadd.s32 %s240, %s241
      %s243 = smul.addr %s242, 4
      %s244 = scalar_lea.vmem %s2, %s243
      %s245 = smul.u32 8, %s21
      %p246 = scmp.lt.s32.totalorder %s20, 1
      %s247 = scalar_select %p246, %s20, 1
      %p248 = scmp.lt.s32.totalorder %s21, 1
      %s249 = scalar_select %p248, %s21, 1
      %s250 = smul.addr %s247, 2
      %s251 = sadd.s32 %s249, %s250
      %s252 = scalar_lea.vmem %s3, %s251
      %p253 = scmp.lt.s32.totalorder %s20, 1
      %s254 = scalar_select %p253, %s20, 1
      %p255 = scmp.lt.s32.totalorder %s21, 1
      %s256 = scalar_select %p255, %s21, 1
      %s257 = smul.addr %s254, 2
      %s258 = sadd.s32 %s256, %s257
      %s259 = scalar_lea.vmem %s4, %s258
      %s261 = smul.u32 %s21, 8
      %s262 = smul.u32 %s261, 3
      %s263 = smul.addr %s262, 4
      %s264 = scalar_lea.vmem %s234, %s263
      %v265 = vld [vmem:[%s264] sm:$0xf]
      %v266 = vld [vmem:[%s264 + $0x4] sm:$0xf]
      %v267 = vld [vmem:[%s264 + $0x8] sm:$0x1]
      %v268 = vld [vmem:[%s264 + $0xc] sm:$0xf]
      %v269 = vld [vmem:[%s264 + $0x10] sm:$0xf]
      %v270 = vld [vmem:[%s264 + $0x14] sm:$0x1]
      %v271 = vld [vmem:[%s264 + $0x18] sm:$0xf]
      %v272 = vld [vmem:[%s264 + $0x1c] sm:$0xf]
      %v273 = vld [vmem:[%s264 + $0x20] sm:$0x1]
      %v274 = vld [vmem:[%s264 + $0x24] sm:$0xf]
      %v275 = vld [vmem:[%s264 + $0x28] sm:$0xf]
      %v276 = vld [vmem:[%s264 + $0x2c] sm:$0x1]
      %v277 = vld [vmem:[%s264 + $0x30] sm:$0xf]
      %v278 = vld [vmem:[%s264 + $0x34] sm:$0xf]
      %v279 = vld [vmem:[%s264 + $0x38] sm:$0x1]
      %v280 = vld [vmem:[%s264 + $0x3c] sm:$0xf]
      %v281 = vld [vmem:[%s264 + $0x40] sm:$0xf]
      %v282 = vld [vmem:[%s264 + $0x44] sm:$0x1]
      %v283 = vld [vmem:[%s264 + $0x48] sm:$0xf]
      %v284 = vld [vmem:[%s264 + $0x4c] sm:$0xf]
      %v285 = vld [vmem:[%s264 + $0x50] sm:$0x1]
      %v286 = vld [vmem:[%s264 + $0x54] sm:$0xf]
      %v287 = vld [vmem:[%s264 + $0x58] sm:$0xf]
      %v288 = vld [vmem:[%s264 + $0x5c] sm:$0x1]
      %v289 = vld [vmem:[%s264 + $0x60] sm:$0xf]
      %v290 = vld [vmem:[%s264 + $0x64] sm:$0xf]
      %v291 = vld [vmem:[%s264 + $0x68] sm:$0x1]
      %v292 = vld [vmem:[%s264 + $0x6c] sm:$0xf]
      %v293 = vld [vmem:[%s264 + $0x70] sm:$0xf]
      %v294 = vld [vmem:[%s264 + $0x74] sm:$0x1]
      %v311 = vunpack.c.l.b16 %v265
      %v312 = vunpack.c.l.b16 %v266
      %v313 = vunpack.c.l.b16 %v268
      %v314 = vunpack.c.l.b16 %v269
      %v315 = vunpack.c.l.b16 %v271
      %v316 = vunpack.c.l.b16 %v272
      %v317 = vunpack.c.l.b16 %v274
      %v318 = vunpack.c.l.b16 %v275
      %v319 = vunpack.c.l.b16 %v277
      %v320 = vunpack.c.l.b16 %v278
      %v321 = vunpack.c.l.b16 %v280
      %v322 = vunpack.c.l.b16 %v281
      %v323 = vunpack.c.l.b16 %v283
      %v324 = vunpack.c.l.b16 %v284
      %v325 = vunpack.c.l.b16 %v286
      %v326 = vunpack.c.l.b16 %v287
      %v327 = vpack.c.b16 %v312, %v311
      %v328 = vpack.c.b16 %v314, %v313
      %v329 = vpack.c.b16 %v316, %v315
      %v330 = vpack.c.b16 %v318, %v317
      %v331 = vpack.c.b16 %v320, %v319
      %v332 = vpack.c.b16 %v322, %v321
      %v333 = vpack.c.b16 %v324, %v323
      %v334 = vpack.c.b16 %v326, %v325
      %v343 = vunpack.c.l.b16 %v267
      %v344 = vunpack.c.l.b16 %v270
      %v345 = vunpack.c.l.b16 %v273
      %v346 = vunpack.c.l.b16 %v276
      %v347 = vunpack.c.l.b16 %v279
      %v348 = vunpack.c.l.b16 %v282
      %v349 = vunpack.c.l.b16 %v285
      %v350 = vunpack.c.l.b16 %v288
      %v351 = vpack.c.b16 %v343, %v343
      %v352 = vpack.c.b16 %v344, %v344
      %v353 = vpack.c.b16 %v345, %v345
      %v354 = vpack.c.b16 %v346, %v346
      %v355 = vpack.c.b16 %v347, %v347
      %v356 = vpack.c.b16 %v348, %v348
      %v357 = vpack.c.b16 %v349, %v349
      %v358 = vpack.c.b16 %v350, %v350
      %vm359 = vsmask.f32 7424
      %v361 = vshrl.u32 %v327, 16
      %v363 = vshll.u32 %v327, 16
      %v365 = vrot.slane %v363, 1
      %v366 = vor.u32 %v361, %v365
      %v368 = vshll.u32 %v351, 16
      %v370 = vrot.slane %v368, 1
      %v371 = vsel %vm359, %v366, %v370
      %v373 = vshrl.u32 %v328, 16
      %v375 = vshll.u32 %v328, 16
      %v377 = vrot.slane %v375, 1
      %v378 = vor.u32 %v373, %v377
      %v380 = vshll.u32 %v352, 16
      %v382 = vrot.slane %v380, 1
      %v383 = vsel %vm359, %v378, %v382
      %v385 = vshrl.u32 %v329, 16
      %v387 = vshll.u32 %v329, 16
      %v389 = vrot.slane %v387, 1
      %v390 = vor.u32 %v385, %v389
      %v392 = vshll.u32 %v353, 16
      %v394 = vrot.slane %v392, 1
      %v395 = vsel %vm359, %v390, %v394
      %v397 = vshrl.u32 %v330, 16
      %v399 = vshll.u32 %v330, 16
      %v401 = vrot.slane %v399, 1
      %v402 = vor.u32 %v397, %v401
      %v404 = vshll.u32 %v354, 16
      %v406 = vrot.slane %v404, 1
      %v407 = vsel %vm359, %v402, %v406
      %v409 = vshrl.u32 %v331, 16
      %v411 = vshll.u32 %v331, 16
      %v413 = vrot.slane %v411, 1
      %v414 = vor.u32 %v409, %v413
      %v416 = vshll.u32 %v355, 16
      %v418 = vrot.slane %v416, 1
      %v419 = vsel %vm359, %v414, %v418
      %v421 = vshrl.u32 %v332, 16
      %v423 = vshll.u32 %v332, 16
      %v425 = vrot.slane %v423, 1
      %v426 = vor.u32 %v421, %v425
      %v428 = vshll.u32 %v356, 16
      %v430 = vrot.slane %v428, 1
      %v431 = vsel %vm359, %v426, %v430
      %v433 = vshrl.u32 %v333, 16
      %v435 = vshll.u32 %v333, 16
      %v437 = vrot.slane %v435, 1
      %v438 = vor.u32 %v433, %v437
      %v440 = vshll.u32 %v357, 16
      %v442 = vrot.slane %v440, 1
      %v443 = vsel %vm359, %v438, %v442
      %v445 = vshrl.u32 %v334, 16
      %v447 = vshll.u32 %v334, 16
      %v449 = vrot.slane %v447, 1
      %v450 = vor.u32 %v445, %v449
      %v452 = vshll.u32 %v358, 16
      %v454 = vrot.slane %v452, 1
      %v455 = vsel %vm359, %v450, %v454
      %456 = vrot.lane.b32.xlu0 %v371, 4
      %v457 = vpop.permute.xlu0 %456
      %458 = vrot.lane.b32.xlu0 %v383, 4
      %v459 = vpop.permute.xlu0 %458
      %460 = vrot.lane.b32.xlu0 %v395, 4
      %v461 = vpop.permute.xlu0 %460
      %462 = vrot.lane.b32.xlu0 %v407, 4
      %v463 = vpop.permute.xlu0 %462
      %464 = vrot.lane.b32.xlu0 %v419, 4
      %v465 = vpop.permute.xlu0 %464
      %466 = vrot.lane.b32.xlu0 %v431, 4
      %v467 = vpop.permute.xlu0 %466
      %468 = vrot.lane.b32.xlu0 %v443, 4
      %v469 = vpop.permute.xlu0 %468
      %470 = vrot.lane.b32.xlu0 %v455, 4
      %v471 = vpop.permute.xlu0 %470
      %vm472 = vcmask 1046528
      %v473 = vrot.slane %v327, 1
      %v474 = vrot.slane %v351, 1
      %v475 = vsel %vm472, %v473, %v474
      %v476 = vrot.slane %v328, 1
      %v477 = vrot.slane %v352, 1
      %v478 = vsel %vm472, %v476, %v477
      %v479 = vrot.slane %v329, 1
      %v480 = vrot.slane %v353, 1
      %v481 = vsel %vm472, %v479, %v480
      %v482 = vrot.slane %v330, 1
      %v483 = vrot.slane %v354, 1
      %v484 = vsel %vm472, %v482, %v483
      %v485 = vrot.slane %v331, 1
      %v486 = vrot.slane %v355, 1
      %v487 = vsel %vm472, %v485, %v486
      %v488 = vrot.slane %v332, 1
      %v489 = vrot.slane %v356, 1
      %v490 = vsel %vm472, %v488, %v489
      %v491 = vrot.slane %v333, 1
      %v492 = vrot.slane %v357, 1
      %v493 = vsel %vm472, %v491, %v492
      %v494 = vrot.slane %v334, 1
      %v495 = vrot.slane %v358, 1
      %v496 = vsel %vm472, %v494, %v495
      %497 = vrot.lane.b32.xlu0 %v475, 8
      %v498 = vpop.permute.xlu0 %497
      %499 = vrot.lane.b32.xlu0 %v478, 8
      %v500 = vpop.permute.xlu0 %499
      %501 = vrot.lane.b32.xlu0 %v481, 8
      %v502 = vpop.permute.xlu0 %501
      %503 = vrot.lane.b32.xlu0 %v484, 8
      %v504 = vpop.permute.xlu0 %503
      %505 = vrot.lane.b32.xlu0 %v487, 8
      %v506 = vpop.permute.xlu0 %505
      %507 = vrot.lane.b32.xlu0 %v490, 8
      %v508 = vpop.permute.xlu0 %507
      %509 = vrot.lane.b32.xlu0 %v493, 8
      %v510 = vpop.permute.xlu0 %509
      %511 = vrot.lane.b32.xlu0 %v496, 8
      %v512 = vpop.permute.xlu0 %511
      %v515 = vunpack.c.l.b16 %v289
      %v516 = vunpack.c.l.b16 %v290
      %v517 = vpack.c.b16 %v516, %v515
      %518 = vrot.lane.b32.xlu0 %v328, 12
      %v519 = vpop.permute.xlu0 %518
      %520 = vrot.lane.b32.xlu0 %v329, 12
      %v521 = vpop.permute.xlu0 %520
      %522 = vrot.lane.b32.xlu0 %v330, 12
      %v523 = vpop.permute.xlu0 %522
      %524 = vrot.lane.b32.xlu0 %v331, 12
      %v525 = vpop.permute.xlu0 %524
      %526 = vrot.lane.b32.xlu0 %v332, 12
      %v527 = vpop.permute.xlu0 %526
      %528 = vrot.lane.b32.xlu0 %v333, 12
      %v529 = vpop.permute.xlu0 %528
      %530 = vrot.lane.b32.xlu0 %v334, 12
      %v531 = vpop.permute.xlu0 %530
      %532 = vrot.lane.b32.xlu0 %v517, 12
      %v533 = vpop.permute.xlu0 %532
      %v535 = vunpack.c.l.b16 %v291
      %v536 = vpack.c.b16 %v535, %v535
      %v538 = vshrl.u32 %v517, 16
      %v540 = vshll.u32 %v517, 16
      %v542 = vrot.slane %v540, 1
      %v543 = vor.u32 %v538, %v542
      %v545 = vshll.u32 %v536, 16
      %v547 = vrot.slane %v545, 1
      %v548 = vsel %vm359, %v543, %v547
      %549 = vrot.lane.b32.xlu0 %v383, 16
      %v550 = vpop.permute.xlu0 %549
      %551 = vrot.lane.b32.xlu0 %v395, 16
      %v552 = vpop.permute.xlu0 %551
      %553 = vrot.lane.b32.xlu0 %v407, 16
      %v554 = vpop.permute.xlu0 %553
      %555 = vrot.lane.b32.xlu0 %v419, 16
      %v556 = vpop.permute.xlu0 %555
      %557 = vrot.lane.b32.xlu0 %v431, 16
      %v558 = vpop.permute.xlu0 %557
      %559 = vrot.lane.b32.xlu0 %v443, 16
      %v560 = vpop.permute.xlu0 %559
      %561 = vrot.lane.b32.xlu0 %v455, 16
      %v562 = vpop.permute.xlu0 %561
      %563 = vrot.lane.b32.xlu0 %v548, 16
      %v564 = vpop.permute.xlu0 %563
      %v565 = vrot.slane %v517, 1
      %v566 = vrot.slane %v536, 1
      %v567 = vsel %vm472, %v565, %v566
      %568 = vrot.lane.b32.xlu0 %v478, 20
      %v569 = vpop.permute.xlu0 %568
      %570 = vrot.lane.b32.xlu0 %v481, 20
      %v571 = vpop.permute.xlu0 %570
      %572 = vrot.lane.b32.xlu0 %v484, 20
      %v573 = vpop.permute.xlu0 %572
      %574 = vrot.lane.b32.xlu0 %v487, 20
      %v575 = vpop.permute.xlu0 %574
      %576 = vrot.lane.b32.xlu0 %v490, 20
      %v577 = vpop.permute.xlu0 %576
      %578 = vrot.lane.b32.xlu0 %v493, 20
      %v579 = vpop.permute.xlu0 %578
      %580 = vrot.lane.b32.xlu0 %v496, 20
      %v581 = vpop.permute.xlu0 %580
      %582 = vrot.lane.b32.xlu0 %v567, 20
      %v583 = vpop.permute.xlu0 %582
      %v586 = vunpack.c.l.b16 %v292
      %v587 = vunpack.c.l.b16 %v293
      %v588 = vpack.c.b16 %v587, %v586
      %589 = vrot.lane.b32.xlu0 %v329, 24
      %v590 = vpop.permute.xlu0 %589
      %591 = vrot.lane.b32.xlu0 %v330, 24
      %v592 = vpop.permute.xlu0 %591
      %593 = vrot.lane.b32.xlu0 %v331, 24
      %v594 = vpop.permute.xlu0 %593
      %595 = vrot.lane.b32.xlu0 %v332, 24
      %v596 = vpop.permute.xlu0 %595
      %597 = vrot.lane.b32.xlu0 %v333, 24
      %v598 = vpop.permute.xlu0 %597
      %599 = vrot.lane.b32.xlu0 %v334, 24
      %v600 = vpop.permute.xlu0 %599
      %601 = vrot.lane.b32.xlu0 %v517, 24
      %v602 = vpop.permute.xlu0 %601
      %603 = vrot.lane.b32.xlu0 %v588, 24
      %v604 = vpop.permute.xlu0 %603
      %v606 = vunpack.c.l.b16 %v294
      %v607 = vpack.c.b16 %v606, %v606
      %v609 = vshrl.u32 %v588, 16
      %v611 = vshll.u32 %v588, 16
      %v613 = vrot.slane %v611, 1
      %v614 = vor.u32 %v609, %v613
      %v616 = vshll.u32 %v607, 16
      %v618 = vrot.slane %v616, 1
      %v619 = vsel %vm359, %v614, %v618
      %620 = vrot.lane.b32.xlu0 %v395, 28
      %v621 = vpop.permute.xlu0 %620
      %622 = vrot.lane.b32.xlu0 %v407, 28
      %v623 = vpop.permute.xlu0 %622
      %624 = vrot.lane.b32.xlu0 %v419, 28
      %v625 = vpop.permute.xlu0 %624
      %626 = vrot.lane.b32.xlu0 %v431, 28
      %v627 = vpop.permute.xlu0 %626
      %628 = vrot.lane.b32.xlu0 %v443, 28
      %v629 = vpop.permute.xlu0 %628
      %630 = vrot.lane.b32.xlu0 %v455, 28
      %v631 = vpop.permute.xlu0 %630
      %632 = vrot.lane.b32.xlu0 %v548, 28
      %v633 = vpop.permute.xlu0 %632
      %634 = vrot.lane.b32.xlu0 %v619, 28
      %v635 = vpop.permute.xlu0 %634
      %v636 = vrot.slane %v588, 1
      %v637 = vrot.slane %v607, 1
      %v638 = vsel %vm472, %v636, %v637
      %639 = vrot.lane.b32.xlu0 %v481, 32
      %v640 = vpop.permute.xlu0 %639
      %641 = vrot.lane.b32.xlu0 %v484, 32
      %v642 = vpop.permute.xlu0 %641
      %643 = vrot.lane.b32.xlu0 %v487, 32
      %v644 = vpop.permute.xlu0 %643
      %645 = vrot.lane.b32.xlu0 %v490, 32
      %v646 = vpop.permute.xlu0 %645
      %647 = vrot.lane.b32.xlu0 %v493, 32
      %v648 = vpop.permute.xlu0 %647
      %649 = vrot.lane.b32.xlu0 %v496, 32
      %v650 = vpop.permute.xlu0 %649
      %651 = vrot.lane.b32.xlu0 %v567, 32
      %v652 = vpop.permute.xlu0 %651
      %653 = vrot.lane.b32.xlu0 %v638, 32
      %v654 = vpop.permute.xlu0 %653
      %vm655 = vcmask 31744
      %v657 = vsel %vm655, %v327, %v457
      %v659 = vsel %vm655, %v328, %v459
      %v661 = vsel %vm655, %v329, %v461
      %v663 = vsel %vm655, %v330, %v463
      %v665 = vsel %vm655, %v331, %v465
      %v667 = vsel %vm655, %v332, %v467
      %v669 = vsel %vm655, %v333, %v469
      %v671 = vsel %vm655, %v334, %v471
      %vm672 = vcmask 64512
      %v674 = vsel %vm672, %v657, %v498
      %v676 = vsel %vm672, %v659, %v500
      %v678 = vsel %vm672, %v661, %v502
      %v680 = vsel %vm672, %v663, %v504
      %v682 = vsel %vm672, %v665, %v506
      %v684 = vsel %vm672, %v667, %v508
      %v686 = vsel %vm672, %v669, %v510
      %v688 = vsel %vm672, %v671, %v512
      %vm689 = vcmask 97280
      %v691 = vsel %vm689, %v674, %v519
      %v693 = vsel %vm689, %v676, %v521
      %v695 = vsel %vm689, %v678, %v523
      %v697 = vsel %vm689, %v680, %v525
      %v699 = vsel %vm689, %v682, %v527
      %v701 = vsel %vm689, %v684, %v529
      %v703 = vsel %vm689, %v686, %v531
      %v705 = vsel %vm689, %v688, %v533
      %vm706 = vcmask 130048
      %v708 = vsel %vm706, %v691, %v550
      %v710 = vsel %vm706, %v693, %v552
      %v712 = vsel %vm706, %v695, %v554
      %v714 = vsel %vm706, %v697, %v556
      %v716 = vsel %vm706, %v699, %v558
      %v718 = vsel %vm706, %v701, %v560
      %v720 = vsel %vm706, %v703, %v562
      %v722 = vsel %vm706, %v705, %v564
      %vm723 = vcmask 162816
      %v725 = vsel %vm723, %v708, %v569
      %v727 = vsel %vm723, %v710, %v571
      %v729 = vsel %vm723, %v712, %v573
      %v731 = vsel %vm723, %v714, %v575
      %v733 = vsel %vm723, %v716, %v577
      %v735 = vsel %vm723, %v718, %v579
      %v737 = vsel %vm723, %v720, %v581
      %v739 = vsel %vm723, %v722, %v583
      %vm740 = vcmask 195584
      %v742 = vsel %vm740, %v725, %v590
      %v744 = vsel %vm740, %v727, %v592
      %v746 = vsel %vm740, %v729, %v594
      %v748 = vsel %vm740, %v731, %v596
      %v750 = vsel %vm740, %v733, %v598
      %v752 = vsel %vm740, %v735, %v600
      %v754 = vsel %vm740, %v737, %v602
      %v756 = vsel %vm740, %v739, %v604
      %vm757 = vcmask 228352
      %v759 = vsel %vm757, %v742, %v621
      %v761 = vsel %vm757, %v744, %v623
      %v763 = vsel %vm757, %v746, %v625
      %v765 = vsel %vm757, %v748, %v627
      %v767 = vsel %vm757, %v750, %v629
      %v769 = vsel %vm757, %v752, %v631
      %v771 = vsel %vm757, %v754, %v633
      %v773 = vsel %vm757, %v756, %v635
      %vm774 = vcmask 261120
      %v776 = vsel %vm774, %v759, %v640
      %v778 = vsel %vm774, %v761, %v642
      %v780 = vsel %vm774, %v763, %v644
      %v782 = vsel %vm774, %v765, %v646
      %v784 = vsel %vm774, %v767, %v648
      %v786 = vsel %vm774, %v769, %v650
      %v788 = vsel %vm774, %v771, %v652
      %v790 = vsel %vm774, %v773, %v654
      %v791 = vld [vmem:[%s1] sm:$0xf]
      %v792 = vld [vmem:[%s1 + $0x4] sm:$0xf]
      %v793 = vld [vmem:[%s1 + $0x8] sm:$0xf]
      %v794 = vld [vmem:[%s1 + $0xc] sm:$0xf]
      %v795 = vld [vmem:[%s1 + $0x10] sm:$0x3]
      %v801 = vunpack.c.l.b16 %v791
      %v802 = vunpack.c.l.b16 %v792
      %v803 = vunpack.c.l.b16 %v793
      %v804 = vunpack.c.l.b16 %v794
      %v805 = vunpack.c.l.b16 %v795
      %v806 = vpack.c.b16 %v802, %v801
      %v807 = vpack.c.b16 %v804, %v803
      %v808 = vpack.c.b16 %v805, %v805
      %vm811 = vcmask 293888
      %v812 = vsel %vm811, %v776, 0
      %v814 = vsel %vm811, %v778, 0
      %v816 = vsel %vm811, %v780, 0
      %v818 = vsel %vm811, %v782, 0
      %v820 = vsel %vm811, %v784, 0
      %v822 = vsel %vm811, %v786, 0
      %v824 = vsel %vm811, %v788, 0
      %v826 = vsel %vm811, %v790, 0
      %vm828 = vcmask 1041408
      %v830 = vsel %vm828, %v808, 0
      %832 = vmatprep.subr.bf16.mxu0 0
      %833 = vmatpush1.bf16.msra.mxu0 %v806
      %834 = vmatprep.subr.bf16.mxu0 0
      %835 = vmatpush1.bf16.msra.mxu0 %v807
      %836 = vmatprep.subr.bf16.mxu0 0
      %837 = vmatpush1.bf16.msra.mxu0 %v830
      %838 = vmatprep.subr.bf16.mxu0 0
      %839 = vmatpush1.bf16.msra.mxu0 0
      %840 = vmatprep.subr.bf16.mxu0 0
      %841 = vmatpush1.bf16.msra.mxu0 0
      %842 = vmatprep.subr.bf16.mxu0 0
      %843 = vmatpush1.bf16.msra.mxu0 0
      %844 = vmatprep.subr.bf16.mxu0 0
      %845 = vmatpush1.bf16.msra.mxu0 0
      %846 = vmatprep.subr.bf16.mxu0 0
      %847 = vmatpush1.bf16.msra.mxu0 0
      %848 = vmatprep.subr.bf16.mxu0 0
      %849 = vmatpush1.bf16.msra.mxu0 0
      %850 = vmatprep.subr.bf16.mxu0 0
      %851 = vmatpush1.bf16.msra.mxu0 0
      %852 = vmatprep.subr.bf16.mxu0 0
      %853 = vmatpush1.bf16.msra.mxu0 0
      %854 = vmatprep.subr.bf16.mxu0 0
      %855 = vmatpush1.bf16.msra.mxu0 0
      %856 = vmatprep.subr.bf16.mxu0 0
      %857 = vmatpush1.bf16.msra.mxu0 0
      %858 = vmatprep.subr.bf16.mxu0 0
      %859 = vmatpush1.bf16.msra.mxu0 0
      %860 = vmatprep.subr.bf16.mxu0 0
      %861 = vmatpush1.bf16.msra.mxu0 0
      %862 = vmatprep.subr.bf16.mxu0 0
      %863 = vmatpush1.bf16.msra.mxu0 0
      %864 = vmatprep.mubr.bf16.mxu0 0
      %865 = vmatmul.mubr.bf16.gmra.mrb[0].mxu0 %v812
      %v866 = vpop.f32.mrb[0].mxu0
      %v867 = vadd.f32 0.0, %v866
      %v868 = vpop.f32.mrb[0].mxu0
      %v869 = vpop.f32.mrb[0].mxu0
      %v870 = vadd.f32 0.0, %v869
      %v871 = vpop.f32.mrb[0].mxu0
      %872 = vmatprep.mubr.bf16.mxu0 0
      %873 = vmatmul.mubr.bf16.gmra.mrb[0].mxu0 %v814
      %v874 = vpop.f32.mrb[0].mxu0
      %v875 = vadd.f32 0.0, %v874
      %v876 = vpop.f32.mrb[0].mxu0
      %v877 = vpop.f32.mrb[0].mxu0
      %v878 = vadd.f32 0.0, %v877
      %v879 = vpop.f32.mrb[0].mxu0
      %880 = vmatprep.mubr.bf16.mxu0 0
      %881 = vmatmul.mubr.bf16.gmra.mrb[0].mxu0 %v816
      %v882 = vpop.f32.mrb[0].mxu0
      %v883 = vadd.f32 0.0, %v882
      %v884 = vpop.f32.mrb[0].mxu0
      %v885 = vpop.f32.mrb[0].mxu0
      %v886 = vadd.f32 0.0, %v885
      %v887 = vpop.f32.mrb[0].mxu0
      %888 = vmatprep.mubr.bf16.mxu0 0
      %889 = vmatmul.mubr.bf16.gmra.mrb[0].mxu0 %v818
      %v890 = vpop.f32.mrb[0].mxu0
      %v891 = vadd.f32 0.0, %v890
      %v892 = vpop.f32.mrb[0].mxu0
      %v893 = vpop.f32.mrb[0].mxu0
      %v894 = vadd.f32 0.0, %v893
      %v895 = vpop.f32.mrb[0].mxu0
      %896 = vmatprep.mubr.bf16.mxu0 0
      %897 = vmatmul.mubr.bf16.gmra.mrb[0].mxu0 %v820
      %v898 = vpop.f32.mrb[0].mxu0
      %v899 = vadd.f32 0.0, %v898
      %v900 = vpop.f32.mrb[0].mxu0
      %v901 = vpop.f32.mrb[0].mxu0
      %v902 = vadd.f32 0.0, %v901
      %v903 = vpop.f32.mrb[0].mxu0
      %904 = vmatprep.mubr.bf16.mxu0 0
      %905 = vmatmul.mubr.bf16.gmra.mrb[0].mxu0 %v822
      %v906 = vpop.f32.mrb[0].mxu0
      %v907 = vadd.f32 0.0, %v906
      %v908 = vpop.f32.mrb[0].mxu0
      %v909 = vpop.f32.mrb[0].mxu0
      %v910 = vadd.f32 0.0, %v909
      %v911 = vpop.f32.mrb[0].mxu0
      %912 = vmatprep.mubr.bf16.mxu0 0
      %913 = vmatmul.mubr.bf16.gmra.mrb[0].mxu0 %v824
      %v914 = vpop.f32.mrb[0].mxu0
      %v915 = vadd.f32 0.0, %v914
      %v916 = vpop.f32.mrb[0].mxu0
      %v917 = vpop.f32.mrb[0].mxu0
      %v918 = vadd.f32 0.0, %v917
      %v919 = vpop.f32.mrb[0].mxu0
      %920 = vmatprep.mubr.bf16.mxu0 0
      %921 = vmatmul.mubr.bf16.gmra.mrb[0].mxu0 %v826
      %v922 = vpop.f32.mrb[0].mxu0
      %v923 = vadd.f32 0.0, %v922
      %v924 = vpop.f32.mrb[0].mxu0
      %v925 = vpop.f32.mrb[0].mxu0
      %v926 = vadd.f32 0.0, %v925
      %v927 = vpop.f32.mrb[0].mxu0
      %928 = vdwg.mxu0
      %v929 = vpack.c.bf16 %v870, %v867
      %v930 = vpack.c.bf16 %v878, %v875
      %v931 = vpack.c.bf16 %v886, %v883
      %v932 = vpack.c.bf16 %v894, %v891
      %v933 = vpack.c.bf16 %v902, %v899
      %v934 = vpack.c.bf16 %v910, %v907
      %v935 = vpack.c.bf16 %v918, %v915
      %v936 = vpack.c.bf16 %v926, %v923
      %v945 = vunpack.c.l.b16 %v929
      %v946 = vunpack.c.h.b16 %v929
      %v947 = vunpack.c.l.b16 %v930
      %v948 = vunpack.c.h.b16 %v930
      %v949 = vunpack.c.l.b16 %v931
      %v950 = vunpack.c.h.b16 %v931
      %v951 = vunpack.c.l.b16 %v932
      %v952 = vunpack.c.h.b16 %v932
      %v953 = vunpack.c.l.b16 %v933
      %v954 = vunpack.c.h.b16 %v933
      %v955 = vunpack.c.l.b16 %v934
      %v956 = vunpack.c.h.b16 %v934
      %v957 = vunpack.c.l.b16 %v935
      %v958 = vunpack.c.h.b16 %v935
      %v959 = vunpack.c.l.b16 %v936
      %v960 = vunpack.c.h.b16 %v936
      %v961 = vpack.c.b16 %v945, %v945
      %v962 = vpack.c.b16 %v946, %v946
      %v963 = vpack.c.b16 %v947, %v947
      %v964 = vpack.c.b16 %v948, %v948
      %v965 = vpack.c.b16 %v949, %v949
      %v966 = vpack.c.b16 %v950, %v950
      %v967 = vpack.c.b16 %v951, %v951
      %v968 = vpack.c.b16 %v952, %v952
      %v969 = vpack.c.b16 %v953, %v953
      %v970 = vpack.c.b16 %v954, %v954
      %v971 = vpack.c.b16 %v955, %v955
      %v972 = vpack.c.b16 %v956, %v956
      %v973 = vpack.c.b16 %v957, %v957
      %v974 = vpack.c.b16 %v958, %v958
      %v975 = vpack.c.b16 %v959, %v959
      %v976 = vpack.c.b16 %v960, %v960
      %993 = vst [vmem:[%s244] sm:$0xf] %v961
      %994 = vst [vmem:[%s244 + $0x4] sm:$0xf] %v962
      %995 = vst [vmem:[%s244 + $0x8] sm:$0xf] %v963
      %996 = vst [vmem:[%s244 + $0xc] sm:$0xf] %v964
      %997 = vst [vmem:[%s244 + $0x10] sm:$0xf] %v965
      %998 = vst [vmem:[%s244 + $0x14] sm:$0xf] %v966
      %999 = vst [vmem:[%s244 + $0x18] sm:$0xf] %v967
      %1000 = vst [vmem:[%s244 + $0x1c] sm:$0xf] %v968
      %1001 = vst [vmem:[%s244 + $0x20] sm:$0xf] %v969
      %1002 = vst [vmem:[%s244 + $0x24] sm:$0xf] %v970
      %1003 = vst [vmem:[%s244 + $0x28] sm:$0xf] %v971
      %1004 = vst [vmem:[%s244 + $0x2c] sm:$0xf] %v972
      %1005 = vst [vmem:[%s244 + $0x30] sm:$0xf] %v973
      %1006 = vst [vmem:[%s244 + $0x34] sm:$0xf] %v974
      %1007 = vst [vmem:[%s244 + $0x38] sm:$0xf] %v975
      %1008 = vst [vmem:[%s244 + $0x3c] sm:$0xf] %v976
      %v1009 = vadd.f32 %v867, %v870
      %v1010 = vadd.f32 %v1009, %v875
      %v1011 = vadd.f32 %v1010, %v878
      %v1012 = vadd.f32 %v1011, %v883
      %v1013 = vadd.f32 %v1012, %v886
      %v1014 = vadd.f32 %v1013, %v891
      %v1015 = vadd.f32 %v1014, %v894
      %v1016 = vadd.f32 %v1015, %v899
      %v1017 = vadd.f32 %v1016, %v902
      %v1018 = vadd.f32 %v1017, %v907
      %v1019 = vadd.f32 %v1018, %v910
      %v1020 = vadd.f32 %v1019, %v915
      %v1021 = vadd.f32 %v1020, %v918
      %v1022 = vadd.f32 %v1021, %v923
      %v1023 = vadd.f32 %v1022, %v926
      %v1024 = vrot.slane %v1023, 4
      %v1025 = vadd.f32 %v1023, %v1024
      %v1026 = vrot.slane %v1025, 2
      %v1027 = vadd.f32 %v1025, %v1026
      %v1028 = vrot.slane %v1027, 1
      %v1029 = vadd.f32 %v1027, %v1028
      %1030 = vst [vmem:[%s252] sm:$0x1] %v1029
      %v1031 = vmul.f32 %v867, %v867
      %v1032 = vmul.f32 %v870, %v870
      %v1033 = vmul.f32 %v875, %v875
      %v1034 = vmul.f32 %v878, %v878
      %v1035 = vmul.f32 %v883, %v883
      %v1036 = vmul.f32 %v886, %v886
      %v1037 = vmul.f32 %v891, %v891
      %v1038 = vmul.f32 %v894, %v894
      %v1039 = vmul.f32 %v899, %v899
      %v1040 = vmul.f32 %v902, %v902
      %v1041 = vmul.f32 %v907, %v907
      %v1042 = vmul.f32 %v910, %v910
      %v1043 = vmul.f32 %v915, %v915
      %v1044 = vmul.f32 %v918, %v918
      %v1045 = vmul.f32 %v923, %v923
      %v1046 = vmul.f32 %v926, %v926
      %v1047 = vadd.f32 %v1031, %v1032
      %v1048 = vadd.f32 %v1047, %v1033
      %v1049 = vadd.f32 %v1048, %v1034
      %v1050 = vadd.f32 %v1049, %v1035
      %v1051 = vadd.f32 %v1050, %v1036
      %v1052 = vadd.f32 %v1051, %v1037
      %v1053 = vadd.f32 %v1052, %v1038
      %v1054 = vadd.f32 %v1053, %v1039
      %v1055 = vadd.f32 %v1054, %v1040
      %v1056 = vadd.f32 %v1055, %v1041
      %v1057 = vadd.f32 %v1056, %v1042
      %v1058 = vadd.f32 %v1057, %v1043
      %v1059 = vadd.f32 %v1058, %v1044
      %v1060 = vadd.f32 %v1059, %v1045
      %v1061 = vadd.f32 %v1060, %v1046
      %v1062 = vrot.slane %v1061, 4
      %v1063 = vadd.f32 %v1061, %v1062
      %v1064 = vrot.slane %v1063, 2
      %v1065 = vadd.f32 %v1063, %v1064
      %v1066 = vrot.slane %v1065, 1
      %v1067 = vadd.f32 %v1065, %v1066
      %1068 = vst [vmem:[%s259] sm:$0x1] %v1067
      %s1069 = smul.u32 8, %s21
      %p1070 = scmp.lt.s32.totalorder %s20, 1
      %s1071 = scalar_select %p1070, %s20, 1
      %p1072 = scmp.lt.s32.totalorder %s1069, 15
      %s1073 = scalar_select %p1072, %s1069, 15
      %s1074 = smul.addr %s1073, 2
      %s1075 = smul.addr %s1071, 32
      %s1076 = sadd.s32 %s1074, %s1075
      %s1077 = smul.addr %s1076, 4
      %s1078 = scalar_lea.vmem %s2, %s1077
      %p1079 = scmp.lt.s32.totalorder %s20, 1
      %s1080 = scalar_select %p1079, %s20, 1
      %p1081 = scmp.lt.s32.totalorder %s21, 1
      %s1082 = scalar_select %p1081, %s21, 1
      %s1083 = smul.addr %s1080, 2
      %s1084 = sadd.s32 %s1082, %s1083
      %s1085 = scalar_lea.vmem %s3, %s1084
      %p1086 = scmp.lt.s32.totalorder %s20, 1
      %s1087 = scalar_select %p1086, %s20, 1
      %p1088 = scmp.lt.s32.totalorder %s21, 1
      %s1089 = scalar_select %p1088, %s21, 1
      %s1090 = smul.addr %s1087, 2
      %s1091 = sadd.s32 %s1089, %s1090
      %s1092 = scalar_lea.vmem %s4, %s1091
      // Predicated region
      $region29: #{basic_conv2d.2} parent=27 // pred_check
        %p1093 = pneg %p95
      $region30: #{basic_conv2d.2} parent=27 // pred_check_branch
        %1095 = sbr.rel (%p1093) target = $region32
      $region31: #{basic_conv2d.2} parent=27 // pred_region
        %s1096 = smul.u32 8, %s21
      $region32: #{basic_conv2d.2} parent=27 // pred_fallthru
        _
      // Predicated region
      $region33: #{basic_conv2d.2} parent=27 // pred_check
        %p1097 = pneg %p123
      $region34: #{basic_conv2d.2} parent=27 // pred_check_branch
        %1099 = sbr.rel (%p1097) target = $region36
      $region35: #{basic_conv2d.2} parent=27 // pred_region
        _
      $region36: #{basic_conv2d.2} parent=27 // pred_fallthru
        _
      // Predicated region
      $region37: #{basic_conv2d.2} parent=27 // pred_check
        %p1100 = pneg %p151
      $region38: #{basic_conv2d.2} parent=27 // pred_check_branch
        %1102 = sbr.rel (%p1100) target = $region40
      $region39: #{basic_conv2d.2} parent=27 // pred_region
        _
      $region40: #{basic_conv2d.2} parent=27 // pred_fallthru
        _
    $region28: #{basic_conv2d.2} parent=5 // pred_fallthru
      _
    %p1103 = scmp.le.s32.totalorder 2, %s11
    // Predicated region
    $region41: #{basic_conv2d.2} parent=5 // pred_check
      %p1104 = pneg %p1103
    $region42: #{basic_conv2d.2} parent=5 // pred_check_branch
      %1106 = sbr.rel (%p1104) target = $region44
    $region43: #{basic_conv2d.2} parent=5 // pred_region
      %s1107 = ssub.s32 %s11, 2
      // Predicated region
      $region45: #{basic_conv2d.2} parent=43 // pred_check
        %p1108 = pneg %p101
      $region46: #{basic_conv2d.2} parent=43 // pred_check_branch
        %1110 = sbr.rel (%p1108) target = $region48
      $region47: #{basic_conv2d.2} parent=43 // pred_region
        %s1111 = smul.u32 8, %s23
        %p1112 = scmp.lt.s32.totalorder %s22, 1
        %s1113 = scalar_select %p1112, %s22, 1
        %p1114 = scmp.lt.s32.totalorder %s1111, 15
        %s1115 = scalar_select %p1114, %s1111, 15
        %s1116 = smul.addr %s1115, 2
        %s1117 = smul.addr %s1113, 32
        %s1118 = sadd.s32 %s1116, %s1117
        %s1119 = smul.addr %s1118, 4
        %s1120 = scalar_lea.vmem %s2, %s1119
      $region48: #{basic_conv2d.2} parent=43 // pred_fallthru
        _
      // Predicated region
      $region49: #{basic_conv2d.2} parent=43 // pred_check
        %p1121 = pneg %p129
      $region50: #{basic_conv2d.2} parent=43 // pred_check_branch
        %1123 = sbr.rel (%p1121) target = $region52
      $region51: #{basic_conv2d.2} parent=43 // pred_region
        %p1124 = scmp.lt.s32.totalorder %s22, 1
        %s1125 = scalar_select %p1124, %s22, 1
        %p1126 = scmp.lt.s32.totalorder %s23, 1
        %s1127 = scalar_select %p1126, %s23, 1
        %s1128 = smul.addr %s1125, 2
        %s1129 = sadd.s32 %s1127, %s1128
        %s1130 = scalar_lea.vmem %s3, %s1129
      $region52: #{basic_conv2d.2} parent=43 // pred_fallthru
        _
      // Predicated region
      $region53: #{basic_conv2d.2} parent=43 // pred_check
        %p1131 = pneg %p157
      $region54: #{basic_conv2d.2} parent=43 // pred_check_branch
        %1133 = sbr.rel (%p1131) target = $region56
      $region55: #{basic_conv2d.2} parent=43 // pred_region
        %p1134 = scmp.lt.s32.totalorder %s22, 1
        %s1135 = scalar_select %p1134, %s22, 1
        %p1136 = scmp.lt.s32.totalorder %s23, 1
        %s1137 = scalar_select %p1136, %s23, 1
        %s1138 = smul.addr %s1135, 2
        %s1139 = sadd.s32 %s1137, %s1138
        %s1140 = scalar_lea.vmem %s4, %s1139
      $region56: #{basic_conv2d.2} parent=43 // pred_fallthru
        _
    $region44: #{basic_conv2d.2} parent=5 // pred_fallthru
      _
  $region6: #{basic_conv2d.2} parent=0 // loop_footer
    %s15 = sadd.s32 1, %s11
  $region7: #{basic_conv2d.2} parent=0 // loop_footer_branch
    %10 = sbr.rel target = $region3
  $region8: #{basic_conv2d.2} parent=0 // loop_exit
    _

</llo_original>
